<compile_context>
chip_gen: v7x
topology: tpu7x:2x2x1
jax: 0.10.0
libtpu: 0.0.40
codegen_flags: <defaults>
</compile_context>

<pallas_src>
import numpy as np
import jax
import jax.numpy as jnp
from jax import lax
from jax.experimental import pallas as pl
from jax.experimental.pallas import tpu as pltpu


# ---------------------------------------------------------------------------
# Fused encoder kernel
# ---------------------------------------------------------------------------

def make_encoder_kernel(n_heads, dim_k, dim_v, batch_block, seq_len):
    H, dk, dv, Bt, L = n_heads, dim_k, dim_v, batch_block, seq_len
    Hdk = H * dk
    bf16 = jnp.bfloat16

    def kernel(x_ref, emb_w_ref, emb_b_ref, pos_ref,
               wqkv_ref, bqkv_ref, wo_ref, bo_ref,
               w1_ref, b1_ref, w2_ref, b2_ref,
               o_ref, h_ref):
        layer = pl.program_id(1)
        D = h_ref.shape[-1]

        # ---- layer 0: embedding + positional encoding into resident scratch ----
        @pl.when(layer == 0)
        def _():
            xf = x_ref[...].reshape(Bt * L, x_ref.shape[-1]).astype(bf16)
            emb = (jnp.dot(xf, emb_w_ref[...], preferred_element_type=jnp.float32)
                   + emb_b_ref[...])
            h_ref[...] = emb.reshape(Bt, L, D) + pos_ref[...]

        x = h_ref[...]                                   # (Bt, L, D) f32 resident
        xb = x.reshape(Bt * L, D).astype(bf16)

        # ---- fused QKV projection: one lane-dense matmul for all heads --------
        # wqkv columns = [Q(all heads, pre-scaled by 1/sqrt(dk)) | K | V]
        qkv = (jnp.dot(xb, wqkv_ref[...], preferred_element_type=jnp.float32)
               + bqkv_ref[...])                          # (Bt*L, H*(2dk+dv)) f32

        # ---- multi-head self-attention (deferred softmax normalization) -------
        ctx_heads = []
        for h in range(H):                               # static unroll (small H)
            qh = qkv[:, h * dk:(h + 1) * dk].reshape(Bt, L, dk).astype(bf16)
            kh = qkv[:, Hdk + h * dk:Hdk + (h + 1) * dk].reshape(Bt, L, dk).astype(bf16)
            vh = qkv[:, 2 * Hdk + h * dv:2 * Hdk + (h + 1) * dv].reshape(Bt, L, dv).astype(bf16)
            s = jnp.einsum('bqd,bkd->bqk', qh, kh,
                           preferred_element_type=jnp.float32)          # (Bt, L, L)
            s = s - jnp.max(s, axis=-1, keepdims=True)
            p = jnp.exp(s)
            denom = jnp.sum(p, axis=-1, keepdims=True)                  # (Bt, L, 1)
            ctx = jnp.einsum('bqk,bkd->bqd', p.astype(bf16), vh,
                             preferred_element_type=jnp.float32)        # (Bt, L, dv)
            # deferred normalization: exact reciprocal on the small ctx tensor
            ctx = ctx * pl.reciprocal(denom, approx=False)
            ctx_heads.append(ctx)

        ctx_all = jnp.concatenate(ctx_heads, axis=-1).reshape(Bt * L, H * dv)
        attn = (jnp.dot(ctx_all.astype(bf16), wo_ref[...],
                        preferred_element_type=jnp.float32)
                + bo_ref[...]).reshape(Bt, L, D) + x                     # residual

        # ---- feed-forward + residual ------------------------------------------
        af = attn.reshape(Bt * L, D).astype(bf16)
        hid = jnp.maximum(
            jnp.dot(af, w1_ref[...], preferred_element_type=jnp.float32)
            + b1_ref[...], 0.0)
        y = (jnp.dot(hid.astype(bf16), w2_ref[...],
                     preferred_element_type=jnp.float32)
             + b2_ref[...]).reshape(Bt, L, D) + attn

        h_ref[...] = y                                   # stay resident for next layer

        @pl.when(layer == pl.num_programs(1) - 1)
        def _():
            o_ref[...] = y.astype(o_ref.dtype)

    return kernel


def encoder_forward(x, emb_w, emb_b, pos_table, packed, n_heads, dim_k, dim_v,
                    batch_block=None):
    """x: (B, L, dim_input) f32 -> (B, L, dim_embedding) f32."""
    B, L, Din = x.shape
    D = emb_w.shape[1]
    n_layers = packed["wqkv"].shape[0]
    Bt = batch_block or B
    assert B % Bt == 0, "batch must be divisible by the batch block"
    pos = pos_table[:L]                                  # (L, D)

    def fixed(shape):
        # Constant index_map -> fetched once for the whole grid (layer-invariant).
        # TODO(synk): pipeline_mode=pl.Buffered(1) would also drop the dead 2nd buffer.
        nd = len(shape)
        return pl.BlockSpec(shape, lambda bb, l, _n=nd: (0,) * _n)

    def per_layer(arr):                                  # stacked (n_layers, ...) weights
        shape = arr.shape
        nd = len(shape)
        return pl.BlockSpec((None,) + shape[1:],
                            lambda bb, l, _n=nd: (l,) + (0,) * (_n - 1))

    kernel = make_encoder_kernel(n_heads, dim_k, dim_v, Bt, L)
    return pl.pallas_call(
        kernel,
        out_shape=jax.ShapeDtypeStruct((B, L, D), jnp.float32),
        grid=(B // Bt, n_layers),
        in_specs=[
            pl.BlockSpec((Bt, L, Din), lambda bb, l: (bb, 0, 0)),   # x (batch-blocked)
            fixed(emb_w.shape),                                     # emb_w (bf16)
            fixed(emb_b.shape),                                     # emb_b
            fixed(pos.shape),                                       # pos
            per_layer(packed["wqkv"]), per_layer(packed["bqkv"]),
            per_layer(packed["wo"]),   per_layer(packed["bo"]),
            per_layer(packed["w1"]),   per_layer(packed["b1"]),
            per_layer(packed["w2"]),   per_layer(packed["b2"]),
        ],
        out_specs=pl.BlockSpec((Bt, L, D), lambda bb, l: (bb, 0, 0)),
        scratch_shapes=[pltpu.VMEM((Bt, L, D), jnp.float32)],       # resident activation
        compiler_params=pltpu.CompilerParams(
            dimension_semantics=("parallel", "arbitrary"),
            # Budgeted for v7x's 64 MiB/TC; plenty of headroom on v5e/v6e (128 MiB).
            vmem_limit_bytes=48 * 1024 * 1024,
        ),
    )(x, emb_w.astype(jnp.bfloat16), emb_b, pos,
      packed["wqkv"], packed["bqkv"], packed["wo"], packed["bo"],
      packed["w1"], packed["b1"], packed["w2"], packed["b2"])


# ---------------------------------------------------------------------------
# Parameter init (PyTorch-Linear-style uniform bounds) and kernel-layout packing
# ---------------------------------------------------------------------------

def _linear_params(key, fan_in, fan_out):
    kw, kb = jax.random.split(key)
    bound = 1.0 / np.sqrt(fan_in)
    w = jax.random.uniform(kw, (fan_in, fan_out), jnp.float32, -bound, bound)
    b = jax.random.uniform(kb, (1, fan_out), jnp.float32, -bound, bound)
    return w, b


def init_encoder_params(key, dim_input, dim_embedding, n_layers, n_heads,
                        dim_k, dim_v, dim_hidden):
    keys = jax.random.split(key, 1 + 6 * n_layers)
    params = {}
    params["emb_w"], params["emb_b"] = _linear_params(keys[0], dim_input, dim_embedding)
    layers = []
    for l in range(n_layers):
        k = keys[1 + 6 * l: 1 + 6 * (l + 1)]
        wq, bq = _linear_params(k[0], dim_embedding, n_heads * dim_k)
        wk, bk = _linear_params(k[1], dim_embedding, n_heads * dim_k)
        wv, bv = _linear_params(k[2], dim_embedding, n_heads * dim_v)
        wo, bo = _linear_params(k[3], n_heads * dim_v, dim_embedding)
        w1, b1 = _linear_params(k[4], dim_embedding, dim_hidden)
        w2, b2 = _linear_params(k[5], dim_hidden, dim_embedding)
        layers.append(dict(wq=wq, bq=bq, wk=wk, bk=bk, wv=wv, bv=bv, wo=wo, bo=bo,
                           w1=w1, b1=b1, w2=w2, b2=b2))
    params["layers"] = layers
    return params


def pack_encoder_params(params, n_heads, dim_k, dim_v, weight_dtype=jnp.bfloat16):
    """Stack per-layer weights in kernel layout.

      wqkv: (n_layers, D, H*(2dk+dv)) bf16   columns = [Q/sqrt(dk) | K | V]
      bqkv: (n_layers, 1, H*(2dk+dv)) f32    (Q part pre-scaled by 1/sqrt(dk))
      wo:   (n_layers, H*dv, D) bf16         bo: (n_layers, 1, D) f32
      w1:   (n_layers, D, Dh)  bf16          b1: (n_layers, 1, Dh) f32
      w2:   (n_layers, Dh, D)  bf16          b2: (n_layers, 1, D) f32
    """
    temp = float(dim_k) ** 0.5
    layers = params["layers"]

    def stack(fn):
        return jnp.stack([fn(lp) for lp in layers])

    return dict(
        wqkv=stack(lambda lp: jnp.concatenate(
            [lp["wq"] / temp, lp["wk"], lp["wv"]], axis=1).astype(weight_dtype)),
        bqkv=stack(lambda lp: jnp.concatenate(
            [lp["bq"] / temp, lp["bk"], lp["bv"]], axis=1)),
        wo=stack(lambda lp: lp["wo"].astype(weight_dtype)),
        bo=stack(lambda lp: lp["bo"]),
        w1=stack(lambda lp: lp["w1"].astype(weight_dtype)),
        b1=stack(lambda lp: lp["b1"]),
        w2=stack(lambda lp: lp["w2"].astype(weight_dtype)),
        b2=stack(lambda lp: lp["b2"]),
    )


def sinusoidal_pos_table(n_pos, dim_model):
    pos = np.asarray([[p / 10000 ** (2 * (i // 2) / dim_model)
                       for i in range(dim_model)] for p in range(n_pos)])
    pos[:, 0::2] = np.sin(pos[:, 0::2])
    pos[:, 1::2] = np.cos(pos[:, 1::2])
    return jnp.asarray(pos, dtype=jnp.float32)            # (n_pos, dim_model)


# ---------------------------------------------------------------------------
# Pure-JAX f32 reference (original, unpacked parameter layout)
# ---------------------------------------------------------------------------

def encoder_forward_ref(x, params, pos_table, n_heads, dim_k, dim_v):
    B, L, Din = x.shape
    h = x @ params["emb_w"] + params["emb_b"][0]
    h = h + pos_table[:L][None, :, :]
    temp = dim_k ** 0.5
    for lp in params["layers"]:
        res = h
        q = (h @ lp["wq"] + lp["bq"][0]).reshape(B, L, n_heads, dim_k).transpose(0, 2, 1, 3)
        k = (h @ lp["wk"] + lp["bk"][0]).reshape(B, L, n_heads, dim_k).transpose(0, 2, 1, 3)
        v = (h @ lp["wv"] + lp["bv"][0]).reshape(B, L, n_heads, dim_v).transpose(0, 2, 1, 3)
        att = jax.nn.softmax((q / temp) @ k.transpose(0, 1, 3, 2), axis=-1)
        ctx = (att @ v).transpose(0, 2, 1, 3).reshape(B, L, n_heads * dim_v)
        h = ctx @ lp["wo"] + lp["bo"][0] + res
        res = h
        ff = jnp.maximum(h @ lp["w1"] + lp["b1"][0], 0.0)
        h = ff @ lp["w2"] + lp["b2"][0] + res
    return h


# ---------------------------------------------------------------------------

if __name__ == "__main__":
    # Small shapes consistent with the module
    B, L = 2, 8
    dim_input, dim_embedding = 16, 32
    n_layers, n_heads, dim_k, dim_v, dim_hidden = 2, 2, 8, 8, 64
    n_pos = 200

    key = jax.random.PRNGKey(0)
    kx, kp = jax.random.split(key)
    x = jax.random.normal(kx, (B, L, dim_input), dtype=jnp.float32)

    params = init_encoder_params(kp, dim_input, dim_embedding, n_layers,
                                 n_heads, dim_k, dim_v, dim_hidden)
    pos_table = sinusoidal_pos_table(n_pos, dim_embedding)
    packed = pack_encoder_params(params, n_heads, dim_k, dim_v)

    out = encoder_forward(x, params["emb_w"], params["emb_b"], pos_table,
                          packed, n_heads, dim_k, dim_v, batch_block=2)
    out = jax.block_until_ready(out)

    ref = encoder_forward_ref(x, params, pos_table, n_heads, dim_k, dim_v)
    assert out.shape == (B, L, dim_embedding)
    # bf16 matmul operands (MXU-native) vs the f32 reference: relative error
    # ~2^-9 per matmul, compounded over 2 layers -> bf16-level tolerance.
    max_err = float(jnp.max(jnp.abs(out - ref)))
    assert jnp.allclose(out, ref, atol=5e-2, rtol=5e-2), \
        f"mismatch vs pure-JAX reference (max abs err {max_err})"

    print("KERNEL_OK")
</pallas_src>

<mosaic_0001>
module attributes {stable_mosaic.version = 11 : i64} {
  func.func @kernel(%arg0: i32, %arg1: i32, %arg2: memref<2x8x16xf32, #tpu.memory_space<vmem>>, %arg3: memref<16x32xbf16, #tpu.memory_space<vmem>>, %arg4: memref<1x32xf32, #tpu.memory_space<vmem>>, %arg5: memref<8x32xf32, #tpu.memory_space<vmem>>, %arg6: memref<1x32x48xbf16, #tpu.memory_space<vmem>>, %arg7: memref<1x1x48xf32, #tpu.memory_space<vmem>>, %arg8: memref<1x16x32xbf16, #tpu.memory_space<vmem>>, %arg9: memref<1x1x32xf32, #tpu.memory_space<vmem>>, %arg10: memref<1x32x64xbf16, #tpu.memory_space<vmem>>, %arg11: memref<1x1x64xf32, #tpu.memory_space<vmem>>, %arg12: memref<1x64x32xbf16, #tpu.memory_space<vmem>>, %arg13: memref<1x1x32xf32, #tpu.memory_space<vmem>>, %arg14: memref<2x8x32xf32, #tpu.memory_space<vmem>>, %arg15: memref<2x8x32xf32, #tpu.memory_space<vmem>>) attributes {dimension_semantics = [#tpu.dimension_semantics<parallel>, #tpu.dimension_semantics<arbitrary>], iteration_bounds = array<i64: 1, 2>, scalar_prefetch = 0 : i64, scratch_operands = 1 : i64, tpu.core_type = #tpu.core_type<tc>, window_params = [{transform_indices = @transform_0, window_bounds = array<i64: 2, 8, 16>}, {pipeline_mode = #tpu.pipeline_mode<synchronous>, transform_indices = @transform_1, window_bounds = array<i64: 16, 32>}, {pipeline_mode = #tpu.pipeline_mode<synchronous>, transform_indices = @transform_2, window_bounds = array<i64: 1, 32>}, {pipeline_mode = #tpu.pipeline_mode<synchronous>, transform_indices = @transform_3, window_bounds = array<i64: 8, 32>}, {transform_indices = @transform_4, window_bounds = array<i64: 1, 32, 48>}, {transform_indices = @transform_5, window_bounds = array<i64: 1, 1, 48>}, {transform_indices = @transform_6, window_bounds = array<i64: 1, 16, 32>}, {transform_indices = @transform_7, window_bounds = array<i64: 1, 1, 32>}, {transform_indices = @transform_8, window_bounds = array<i64: 1, 32, 64>}, {transform_indices = @transform_9, window_bounds = array<i64: 1, 1, 64>}, {transform_indices = @transform_10, window_bounds = array<i64: 1, 64, 32>}, {transform_indices = @transform_11, window_bounds = array<i64: 1, 1, 32>}, {transform_indices = @transform_12, window_bounds = array<i64: 2, 8, 32>}]} {
    %c0_i32 = arith.constant 0 : i32
    %0 = arith.cmpi eq, %arg1, %c0_i32 : i32
    %1 = arith.extui %0 : i1 to i32
    %c0_i32_0 = arith.constant 0 : i32
    %2 = arith.cmpi ne, %1, %c0_i32_0 : i32
    scf.if %2 {
      %c0_43 = arith.constant 0 : index
      %c0_44 = arith.constant 0 : index
      %c0_45 = arith.constant 0 : index
      %94 = vector.load %arg2[%c0_43, %c0_44, %c0_45] : memref<2x8x16xf32, #tpu.memory_space<vmem>>, vector<2x8x16xf32>
      %95 = vector.shape_cast %94 : vector<2x8x16xf32> to vector<16x16xf32>
      %96 = arith.truncf %95 : vector<16x16xf32> to vector<16x16xbf16>
      %c0_46 = arith.constant 0 : index
      %c0_47 = arith.constant 0 : index
      %97 = vector.load %arg3[%c0_46, %c0_47] : memref<16x32xbf16, #tpu.memory_space<vmem>>, vector<16x32xbf16>
      %cst_48 = arith.constant dense<0.000000e+00> : vector<16x32xf32>
      %98 = tpu.matmul %96, %97, %cst_48 {dimension_numbers = #tpu.dot_dimension_numbers<[1], [0], [0], [1], [0, 0, 1, 1], [], []>} : vector<16x16xbf16>, vector<16x32xbf16>, vector<16x32xf32> -> vector<16x32xf32>
      %c0_49 = arith.constant 0 : index
      %c0_50 = arith.constant 0 : index
      %99 = vector.load %arg4[%c0_49, %c0_50] : memref<1x32xf32, #tpu.memory_space<vmem>>, vector<1x32xf32>
      %100 = vector.broadcast %99 : vector<1x32xf32> to vector<16x32xf32>
      %101 = arith.addf %98, %100 : vector<16x32xf32>
      %102 = vector.shape_cast %101 : vector<16x32xf32> to vector<2x8x32xf32>
      %c0_51 = arith.constant 0 : index
      %c0_52 = arith.constant 0 : index
      %103 = vector.load %arg5[%c0_51, %c0_52] : memref<8x32xf32, #tpu.memory_space<vmem>>, vector<8x32xf32>
      %104 = vector.shape_cast %103 : vector<8x32xf32> to vector<1x8x32xf32>
      %105 = vector.broadcast %104 : vector<1x8x32xf32> to vector<2x8x32xf32>
      %106 = arith.addf %102, %105 : vector<2x8x32xf32>
      %c0_53 = arith.constant 0 : index
      %c0_54 = arith.constant 0 : index
      %c0_55 = arith.constant 0 : index
      %107 = vector.load %arg15[%c0_53, %c0_54, %c0_55] : memref<2x8x32xf32, #tpu.memory_space<vmem>>, vector<2x8x32xf32>
      tpu.vector_store %arg15[%c0_53, %c0_54, %c0_55], %106 {strides = array<i32>} : memref<2x8x32xf32, #tpu.memory_space<vmem>>, vector<2x8x32xf32>,
    } else {
    }
    %c0 = arith.constant 0 : index
    %c0_1 = arith.constant 0 : index
    %c0_2 = arith.constant 0 : index
    %3 = vector.load %arg15[%c0, %c0_1, %c0_2] : memref<2x8x32xf32, #tpu.memory_space<vmem>>, vector<2x8x32xf32>
    %4 = vector.shape_cast %3 : vector<2x8x32xf32> to vector<16x32xf32>
    %5 = arith.truncf %4 : vector<16x32xf32> to vector<16x32xbf16>
    %c0_3 = arith.constant 0 : index
    %c0_4 = arith.constant 0 : index
    %c0_5 = arith.constant 0 : index
    %6 = vector.load %arg6[%c0_3, %c0_4, %c0_5] : memref<1x32x48xbf16, #tpu.memory_space<vmem>>, vector<1x32x48xbf16>
    %7 = vector.shape_cast %6 : vector<1x32x48xbf16> to vector<32x48xbf16>
    %cst = arith.constant dense<0.000000e+00> : vector<16x48xf32>
    %8 = tpu.matmul %5, %7, %cst {dimension_numbers = #tpu.dot_dimension_numbers<[1], [0], [0], [1], [0, 0, 1, 1], [], []>} : vector<16x32xbf16>, vector<32x48xbf16>, vector<16x48xf32> -> vector<16x48xf32>
    %c0_6 = arith.constant 0 : index
    %c0_7 = arith.constant 0 : index
    %c0_8 = arith.constant 0 : index
    %9 = vector.load %arg7[%c0_6, %c0_7, %c0_8] : memref<1x1x48xf32, #tpu.memory_space<vmem>>, vector<1x1x48xf32>
    %10 = vector.shape_cast %9 : vector<1x1x48xf32> to vector<1x48xf32>
    %11 = vector.broadcast %10 : vector<1x48xf32> to vector<16x48xf32>
    %12 = arith.addf %8, %11 : vector<16x48xf32>
    %13 = vector.extract_strided_slice %12 {offsets = [0, 0], sizes = [16, 8], strides = [1, 1]} : vector<16x48xf32> to vector<16x8xf32>
    %14 = vector.shape_cast %13 : vector<16x8xf32> to vector<2x8x8xf32>
    %15 = arith.truncf %14 : vector<2x8x8xf32> to vector<2x8x8xbf16>
    %16 = vector.extract_strided_slice %12 {offsets = [0, 16], sizes = [16, 8], strides = [1, 1]} : vector<16x48xf32> to vector<16x8xf32>
    %17 = vector.shape_cast %16 : vector<16x8xf32> to vector<2x8x8xf32>
    %18 = arith.truncf %17 : vector<2x8x8xf32> to vector<2x8x8xbf16>
    %19 = vector.extract_strided_slice %12 {offsets = [0, 32], sizes = [16, 8], strides = [1, 1]} : vector<16x48xf32> to vector<16x8xf32>
    %20 = vector.shape_cast %19 : vector<16x8xf32> to vector<2x8x8xf32>
    %21 = arith.truncf %20 : vector<2x8x8xf32> to vector<2x8x8xbf16>
    "tpu.trace_start"() <{level = 10 : i32, message = "bqd,bkd->bqk"}> : () -> ()
    %cst_9 = arith.constant dense<0.000000e+00> : vector<2x8x8xf32>
    %22 = tpu.matmul %15, %18, %cst_9 {dimension_numbers = #tpu.dot_dimension_numbers<[2], [2], [1], [1], [0, 0, 0, 1, 1, 1], [0], [0]>} : vector<2x8x8xbf16>, vector<2x8x8xbf16>, vector<2x8x8xf32> -> vector<2x8x8xf32>
    "tpu.trace_stop"() : () -> ()
    %cst_10 = arith.constant dense<0xFF800000> : vector<2x8xf32>
    %23 = vector.multi_reduction <maximumf>, %22, %cst_10 [2] : vector<2x8x8xf32> to vector<2x8xf32>
    %24 = vector.shape_cast %23 : vector<2x8xf32> to vector<2x8x1xf32>
    %25 = vector.broadcast %24 : vector<2x8x1xf32> to vector<2x8x8xf32>
    %26 = arith.subf %22, %25 : vector<2x8x8xf32>
    %27 = math.exp %26 : vector<2x8x8xf32>
    %cst_11 = arith.constant dense<0.000000e+00> : vector<2x8xf32>
    %28 = vector.multi_reduction <add>, %27, %cst_11 [2] : vector<2x8x8xf32> to vector<2x8xf32>
    %29 = vector.shape_cast %28 : vector<2x8xf32> to vector<2x8x1xf32>
    %30 = arith.truncf %27 : vector<2x8x8xf32> to vector<2x8x8xbf16>
    "tpu.trace_start"() <{level = 10 : i32, message = "bqk,bkd->bqd"}> : () -> ()
    %cst_12 = arith.constant dense<0.000000e+00> : vector<2x8x8xf32>
    %31 = tpu.matmul %30, %21, %cst_12 {dimension_numbers = #tpu.dot_dimension_numbers<[2], [1], [1], [2], [0, 0, 0, 1, 1, 2], [0], [0]>} : vector<2x8x8xbf16>, vector<2x8x8xbf16>, vector<2x8x8xf32> -> vector<2x8x8xf32>
    "tpu.trace_stop"() : () -> ()
    %32 = tpu.reciprocal %29 : vector<2x8x1xf32> -> vector<2x8x1xf32>
    %33 = vector.broadcast %32 : vector<2x8x1xf32> to vector<2x8x8xf32>
    %34 = arith.mulf %31, %33 : vector<2x8x8xf32>
    %35 = vector.extract_strided_slice %12 {offsets = [0, 8], sizes = [16, 8], strides = [1, 1]} : vector<16x48xf32> to vector<16x8xf32>
    %36 = vector.shape_cast %35 : vector<16x8xf32> to vector<2x8x8xf32>
    %37 = arith.truncf %36 : vector<2x8x8xf32> to vector<2x8x8xbf16>
    %38 = vector.extract_strided_slice %12 {offsets = [0, 24], sizes = [16, 8], strides = [1, 1]} : vector<16x48xf32> to vector<16x8xf32>
    %39 = vector.shape_cast %38 : vector<16x8xf32> to vector<2x8x8xf32>
    %40 = arith.truncf %39 : vector<2x8x8xf32> to vector<2x8x8xbf16>
    %41 = vector.extract_strided_slice %12 {offsets = [0, 40], sizes = [16, 8], strides = [1, 1]} : vector<16x48xf32> to vector<16x8xf32>
    %42 = vector.shape_cast %41 : vector<16x8xf32> to vector<2x8x8xf32>
    %43 = arith.truncf %42 : vector<2x8x8xf32> to vector<2x8x8xbf16>
    "tpu.trace_start"() <{level = 10 : i32, message = "bqd,bkd->bqk"}> : () -> ()
    %cst_13 = arith.constant dense<0.000000e+00> : vector<2x8x8xf32>
    %44 = tpu.matmul %37, %40, %cst_13 {dimension_numbers = #tpu.dot_dimension_numbers<[2], [2], [1], [1], [0, 0, 0, 1, 1, 1], [0], [0]>} : vector<2x8x8xbf16>, vector<2x8x8xbf16>, vector<2x8x8xf32> -> vector<2x8x8xf32>
    "tpu.trace_stop"() : () -> ()
    %cst_14 = arith.constant dense<0xFF800000> : vector<2x8xf32>
    %45 = vector.multi_reduction <maximumf>, %44, %cst_14 [2] : vector<2x8x8xf32> to vector<2x8xf32>
    %46 = vector.shape_cast %45 : vector<2x8xf32> to vector<2x8x1xf32>
    %47 = vector.broadcast %46 : vector<2x8x1xf32> to vector<2x8x8xf32>
    %48 = arith.subf %44, %47 : vector<2x8x8xf32>
    %49 = math.exp %48 : vector<2x8x8xf32>
    %cst_15 = arith.constant dense<0.000000e+00> : vector<2x8xf32>
    %50 = vector.multi_reduction <add>, %49, %cst_15 [2] : vector<2x8x8xf32> to vector<2x8xf32>
    %51 = vector.shape_cast %50 : vector<2x8xf32> to vector<2x8x1xf32>
    %52 = arith.truncf %49 : vector<2x8x8xf32> to vector<2x8x8xbf16>
    "tpu.trace_start"() <{level = 10 : i32, message = "bqk,bkd->bqd"}> : () -> ()
    %cst_16 = arith.constant dense<0.000000e+00> : vector<2x8x8xf32>
    %53 = tpu.matmul %52, %43, %cst_16 {dimension_numbers = #tpu.dot_dimension_numbers<[2], [1], [1], [2], [0, 0, 0, 1, 1, 2], [0], [0]>} : vector<2x8x8xbf16>, vector<2x8x8xbf16>, vector<2x8x8xf32> -> vector<2x8x8xf32>
    "tpu.trace_stop"() : () -> ()
    %54 = tpu.reciprocal %51 : vector<2x8x1xf32> -> vector<2x8x1xf32>
    %55 = vector.broadcast %54 : vector<2x8x1xf32> to vector<2x8x8xf32>
    %56 = arith.mulf %53, %55 : vector<2x8x8xf32>
    %57 = tpu.concatenate %34, %56 in 2 : vector<2x8x8xf32>, vector<2x8x8xf32> -> vector<2x8x16xf32>
    %58 = vector.shape_cast %57 : vector<2x8x16xf32> to vector<16x16xf32>
    %59 = arith.truncf %58 : vector<16x16xf32> to vector<16x16xbf16>
    %c0_17 = arith.constant 0 : index
    %c0_18 = arith.constant 0 : index
    %c0_19 = arith.constant 0 : index
    %60 = vector.load %arg8[%c0_17, %c0_18, %c0_19] : memref<1x16x32xbf16, #tpu.memory_space<vmem>>, vector<1x16x32xbf16>
    %61 = vector.shape_cast %60 : vector<1x16x32xbf16> to vector<16x32xbf16>
    %cst_20 = arith.constant dense<0.000000e+00> : vector<16x32xf32>
    %62 = tpu.matmul %59, %61, %cst_20 {dimension_numbers = #tpu.dot_dimension_numbers<[1], [0], [0], [1], [0, 0, 1, 1], [], []>} : vector<16x16xbf16>, vector<16x32xbf16>, vector<16x32xf32> -> vector<16x32xf32>
    %c0_21 = arith.constant 0 : index
    %c0_22 = arith.constant 0 : index
    %c0_23 = arith.constant 0 : index
    %63 = vector.load %arg9[%c0_21, %c0_22, %c0_23] : memref<1x1x32xf32, #tpu.memory_space<vmem>>, vector<1x1x32xf32>
    %64 = vector.shape_cast %63 : vector<1x1x32xf32> to vector<1x32xf32>
    %65 = vector.broadcast %64 : vector<1x32xf32> to vector<16x32xf32>
    %66 = arith.addf %62, %65 : vector<16x32xf32>
    %67 = vector.shape_cast %66 : vector<16x32xf32> to vector<2x8x32xf32>
    %68 = arith.addf %67, %3 : vector<2x8x32xf32>
    %69 = vector.shape_cast %68 : vector<2x8x32xf32> to vector<16x32xf32>
    %70 = arith.truncf %69 : vector<16x32xf32> to vector<16x32xbf16>
    %c0_24 = arith.constant 0 : index
    %c0_25 = arith.constant 0 : index
    %c0_26 = arith.constant 0 : index
    %71 = vector.load %arg10[%c0_24, %c0_25, %c0_26] : memref<1x32x64xbf16, #tpu.memory_space<vmem>>, vector<1x32x64xbf16>
    %72 = vector.shape_cast %71 : vector<1x32x64xbf16> to vector<32x64xbf16>
    %cst_27 = arith.constant dense<0.000000e+00> : vector<16x64xf32>
    %73 = tpu.matmul %70, %72, %cst_27 {dimension_numbers = #tpu.dot_dimension_numbers<[1], [0], [0], [1], [0, 0, 1, 1], [], []>} : vector<16x32xbf16>, vector<32x64xbf16>, vector<16x64xf32> -> vector<16x64xf32>
    %c0_28 = arith.constant 0 : index
    %c0_29 = arith.constant 0 : index
    %c0_30 = arith.constant 0 : index
    %74 = vector.load %arg11[%c0_28, %c0_29, %c0_30] : memref<1x1x64xf32, #tpu.memory_space<vmem>>, vector<1x1x64xf32>
    %75 = vector.shape_cast %74 : vector<1x1x64xf32> to vector<1x64xf32>
    %76 = vector.broadcast %75 : vector<1x64xf32> to vector<16x64xf32>
    %77 = arith.addf %73, %76 : vector<16x64xf32>
    %cst_31 = arith.constant 0.000000e+00 : f32
    %78 = vector.broadcast %cst_31 : f32 to vector<16x64xf32>
    %79 = arith.maximumf %77, %78 : vector<16x64xf32>
    %80 = arith.truncf %79 : vector<16x64xf32> to vector<16x64xbf16>
    %c0_32 = arith.constant 0 : index
    %c0_33 = arith.constant 0 : index
    %c0_34 = arith.constant 0 : index
    %81 = vector.load %arg12[%c0_32, %c0_33, %c0_34] : memref<1x64x32xbf16, #tpu.memory_space<vmem>>, vector<1x64x32xbf16>
    %82 = vector.shape_cast %81 : vector<1x64x32xbf16> to vector<64x32xbf16>
    %cst_35 = arith.constant dense<0.000000e+00> : vector<16x32xf32>
    %83 = tpu.matmul %80, %82, %cst_35 {dimension_numbers = #tpu.dot_dimension_numbers<[1], [0], [0], [1], [0, 0, 1, 1], [], []>} : vector<16x64xbf16>, vector<64x32xbf16>, vector<16x32xf32> -> vector<16x32xf32>
    %c0_36 = arith.constant 0 : index
    %c0_37 = arith.constant 0 : index
    %c0_38 = arith.constant 0 : index
    %84 = vector.load %arg13[%c0_36, %c0_37, %c0_38] : memref<1x1x32xf32, #tpu.memory_space<vmem>>, vector<1x1x32xf32>
    %85 = vector.shape_cast %84 : vector<1x1x32xf32> to vector<1x32xf32>
    %86 = vector.broadcast %85 : vector<1x32xf32> to vector<16x32xf32>
    %87 = arith.addf %83, %86 : vector<16x32xf32>
    %88 = vector.shape_cast %87 : vector<16x32xf32> to vector<2x8x32xf32>
    %89 = arith.addf %88, %68 : vector<2x8x32xf32>
    %c0_39 = arith.constant 0 : index
    %c0_40 = arith.constant 0 : index
    %c0_41 = arith.constant 0 : index
    %90 = vector.load %arg15[%c0_39, %c0_40, %c0_41] : memref<2x8x32xf32, #tpu.memory_space<vmem>>, vector<2x8x32xf32>
    tpu.vector_store %arg15[%c0_39, %c0_40, %c0_41], %89 {strides = array<i32>} : memref<2x8x32xf32, #tpu.memory_space<vmem>>, vector<2x8x32xf32>,
    %c1_i32 = arith.constant 1 : i32
    %91 = arith.cmpi eq, %arg1, %c1_i32 : i32
    %92 = arith.extui %91 : i1 to i32
    %c0_i32_42 = arith.constant 0 : i32
    %93 = arith.cmpi ne, %92, %c0_i32_42 : i32
    scf.if %93 {
      %c0_43 = arith.constant 0 : index
      %c0_44 = arith.constant 0 : index
      %c0_45 = arith.constant 0 : index
      %94 = vector.load %arg14[%c0_43, %c0_44, %c0_45] : memref<2x8x32xf32, #tpu.memory_space<vmem>>, vector<2x8x32xf32>
      tpu.vector_store %arg14[%c0_43, %c0_44, %c0_45], %89 {strides = array<i32>} : memref<2x8x32xf32, #tpu.memory_space<vmem>>, vector<2x8x32xf32>,
    } else {
    }
    return
  }
  func.func @transform_0(%arg0: i32, %arg1: i32) -> (i32, i32, i32) {
    %c0_i32 = arith.constant 0 : i32
    %c0_i32_0 = arith.constant 0 : i32
    %c0_i32_1 = arith.constant 0 : i32
    return %arg0, %c0_i32, %c0_i32_0 : i32, i32, i32
  }
  func.func @transform_1(%arg0: i32, %arg1: i32) -> (i32, i32) {
    %c0_i32 = arith.constant 0 : i32
    %c0_i32_0 = arith.constant 0 : i32
    %c0_i32_1 = arith.constant 0 : i32
    return %c0_i32, %c0_i32_0 : i32, i32
  }
  func.func @transform_2(%arg0: i32, %arg1: i32) -> (i32, i32) {
    %c0_i32 = arith.constant 0 : i32
    %c0_i32_0 = arith.constant 0 : i32
    %c0_i32_1 = arith.constant 0 : i32
    return %c0_i32, %c0_i32_0 : i32, i32
  }
  func.func @transform_3(%arg0: i32, %arg1: i32) -> (i32, i32) {
    %c0_i32 = arith.constant 0 : i32
    %c0_i32_0 = arith.constant 0 : i32
    %c0_i32_1 = arith.constant 0 : i32
    return %c0_i32, %c0_i32_0 : i32, i32
  }
  func.func @transform_4(%arg0: i32, %arg1: i32) -> (i32, i32, i32) {
    %c0_i32 = arith.constant 0 : i32
    %c0_i32_0 = arith.constant 0 : i32
    %c0_i32_1 = arith.constant 0 : i32
    return %arg1, %c0_i32, %c0_i32_0 : i32, i32, i32
  }
  func.func @transform_5(%arg0: i32, %arg1: i32) -> (i32, i32, i32) {
    %c0_i32 = arith.constant 0 : i32
    %c0_i32_0 = arith.constant 0 : i32
    %c0_i32_1 = arith.constant 0 : i32
    return %arg1, %c0_i32, %c0_i32_0 : i32, i32, i32
  }
  func.func @transform_6(%arg0: i32, %arg1: i32) -> (i32, i32, i32) {
    %c0_i32 = arith.constant 0 : i32
    %c0_i32_0 = arith.constant 0 : i32
    %c0_i32_1 = arith.constant 0 : i32
    return %arg1, %c0_i32, %c0_i32_0 : i32, i32, i32
  }
  func.func @transform_7(%arg0: i32, %arg1: i32) -> (i32, i32, i32) {
    %c0_i32 = arith.constant 0 : i32
    %c0_i32_0 = arith.constant 0 : i32
    %c0_i32_1 = arith.constant 0 : i32
    return %arg1, %c0_i32, %c0_i32_0 : i32, i32, i32
  }
  func.func @transform_8(%arg0: i32, %arg1: i32) -> (i32, i32, i32) {
    %c0_i32 = arith.constant 0 : i32
    %c0_i32_0 = arith.constant 0 : i32
    %c0_i32_1 = arith.constant 0 : i32
    return %arg1, %c0_i32, %c0_i32_0 : i32, i32, i32
  }
  func.func @transform_9(%arg0: i32, %arg1: i32) -> (i32, i32, i32) {
    %c0_i32 = arith.constant 0 : i32
    %c0_i32_0 = arith.constant 0 : i32
    %c0_i32_1 = arith.constant 0 : i32
    return %arg1, %c0_i32, %c0_i32_0 : i32, i32, i32
  }
  func.func @transform_10(%arg0: i32, %arg1: i32) -> (i32, i32, i32) {
    %c0_i32 = arith.constant 0 : i32
    %c0_i32_0 = arith.constant 0 : i32
    %c0_i32_1 = arith.constant 0 : i32
    return %arg1, %c0_i32, %c0_i32_0 : i32, i32, i32
  }
  func.func @transform_11(%arg0: i32, %arg1: i32) -> (i32, i32, i32) {
    %c0_i32 = arith.constant 0 : i32
    %c0_i32_0 = arith.constant 0 : i32
    %c0_i32_1 = arith.constant 0 : i32
    return %arg1, %c0_i32, %c0_i32_0 : i32, i32, i32
  }
  func.func @transform_12(%arg0: i32, %arg1: i32) -> (i32, i32, i32) {
    %c0_i32 = arith.constant 0 : i32
    %c0_i32_0 = arith.constant 0 : i32
    %c0_i32_1 = arith.constant 0 : i32
    return %arg0, %c0_i32, %c0_i32_0 : i32, i32, i32
  }
}

</mosaic_0001>

<llo_original>
// kernel: tpu_custom_call.1
$region0: #{tpu_custom_call.1}
  #allocation0 [shape = 'u32[]', space=smem, size = 0x4, offset = 0x4, fixed_abs, tag = 'smem constant byte address 0x4 - core index']
  #allocation1 [shape = 'u32[144,128]{1,0:T(1,128)}', space=vmem, size = 0x12000, scoped, tag = 'internal scratch']
  #allocation2 [shape = 'f32[2,8,32]{2,1,0:T(8,128)}', space=vmem, size = 0x2000, scoped, tag = 'scratch operand']
  %s0 = inlined_call_operand.vmem [shape: f32[2,8,16], index: 0, kind: input, shape index: {}]
  %s1 = inlined_call_operand.hbm [shape: bf16[16,32], index: 1, kind: input, shape index: {}]
  %s2 = inlined_call_operand.vmem [shape: f32[1,32], index: 2, kind: input, shape index: {}]
  %s3 = inlined_call_operand.hbm [shape: f32[8,32], index: 3, kind: input, shape index: {}]
  %s4 = inlined_call_operand.vmem [shape: bf16[2,32,48], index: 4, kind: input, shape index: {}]
  %s5 = inlined_call_operand.vmem [shape: f32[2,1,48], index: 5, kind: input, shape index: {}]
  %s6 = inlined_call_operand.vmem [shape: bf16[2,16,32], index: 6, kind: input, shape index: {}]
  %s7 = inlined_call_operand.vmem [shape: f32[2,1,32], index: 7, kind: input, shape index: {}]
  %s8 = inlined_call_operand.vmem [shape: bf16[2,32,64], index: 8, kind: input, shape index: {}]
  %s9 = inlined_call_operand.hbm [shape: f32[2,1,64], index: 9, kind: input, shape index: {}]
  %s10 = inlined_call_operand.vmem [shape: bf16[2,64,32], index: 10, kind: input, shape index: {}]
  %s11 = inlined_call_operand.vmem [shape: f32[2,1,32], index: 11, kind: input, shape index: {}]
  %s12 = inlined_call_operand.hbm [shape: f32[2,8,32], index: 12, kind: output, shape index: {}]
  %s13 = sld [smem:[#allocation0]]
  $region101: #{tpu_custom_call.1} parent=0
    _
  %s15 = ssub.s32 1, %s13
  %s16 = scalar_select 0, %s15, %s13
  $region1: #{tpu_custom_call.1} parent=0
    #allocation3 [shape = 'u8[4096]{0}', space=vmem, size = 0x1000, scoped, tag = 'input window, operand 1, single buffered']
    #allocation4 [shape = 's32[2]{0}', space=sflag, size = 0x8, scoped, tag = 'scoped memory for tpu_custom_call.1']
    #allocation5 [shape = 's32[2]{0}', space=sflag, size = 0x8, scoped, tag = 'scoped memory for tpu_custom_call.1']
    #allocation6 [shape = 'u8[4096]{0}', space=vmem, size = 0x1000, scoped, tag = 'input window, operand 3, single buffered']
    #allocation7 [shape = 's32[1]{0}', space=sflag, size = 0x4, scoped, tag = 'scoped memory for tpu_custom_call.1']
    #allocation8 [shape = 'u8[1024]{0}', space=vmem, size = 0x400, scoped, tag = 'input window, operand 9']
    #allocation9 [shape = 'u8[8192]{0}', space=vmem, size = 0x2000, scoped, tag = 'output window, operand 0, single buffered']
    %17 = vsyncpa [#allocation4], 0
    %18 = vsyncpa [#allocation7], 0
    %19 = vsyncpa [#allocation5], 0
    loop: start=0, step=1, limit=4
    $region2: #{tpu_custom_call.1} parent=1 // loop_pre_header
      _
    $region3: #{tpu_custom_call.1} parent=1 // loop_header
      %s21 = sphi 0, %s25
      %p22 = scmp.ge.s32.totalorder %s21, 4
      %s28 = sphi 0, %s40
      %s29 = sphi 0, %s36
      %s30 = sphi 0, %s28
      %s31 = sphi 0, %s29
      %s32 = sphi 0, %s30
      %s33 = sphi 0, %s31
      %s43 = sphi 0, %s45
      %s46 = sphi 0, %s43
      %s47 = sphi 0, %s46
      %s63 = sphi 0, %s47
      %s67 = sphi 0, %s67
      %s69 = sphi 0, %s67
      %s70 = sphi 0, %s69
      %s84 = sphi 0, %s70
      %s88 = sphi 0, %s88
      %s90 = sphi 0, %s88
      %s91 = sphi 0, %s90
      %s105 = sphi 0, %s91
      %s109 = sphi 0, %s109
      %s111 = sphi 0, %s109
      %s112 = sphi 0, %s111
      %s126 = sphi 0, %s112
      %s132 = sphi 0, %s134
      %s135 = sphi 0, %s132
      %s136 = sphi 0, %s135
      %s152 = sphi 0, %s136
      %s158 = sphi 0, %s160
      %s161 = sphi 0, %s158
      %s162 = sphi 0, %s161
      %s178 = sphi 0, %s162
      %s184 = sphi 0, %s186
      %s187 = sphi 0, %s184
      %s188 = sphi 0, %s187
      %s204 = sphi 0, %s188
      %s210 = sphi 0, %s212
      %s213 = sphi 0, %s210
      %s214 = sphi 0, %s213
      %s230 = sphi 0, %s214
      %s236 = sphi 0, %s238
      %s239 = sphi 0, %s236
      %s240 = sphi 0, %s239
      %s256 = sphi 0, %s240
      %s262 = sphi 0, %s264
      %s265 = sphi 0, %s262
      %s266 = sphi 0, %s265
      %s282 = sphi 0, %s266
      %s288 = sphi 0, %s290
      %s291 = sphi 0, %s288
      %s292 = sphi 0, %s291
      %s308 = sphi 0, %s292
      %s314 = sphi 0, %s316
      %s317 = sphi 0, %s314
      %s318 = sphi 0, %s317
      %s334 = sphi 0, %s318
      %s340 = sphi 0, %s342
      %s343 = sphi 0, %s340
      %s344 = sphi 0, %s343
      %s360 = sphi 0, %s344
    $region4: #{tpu_custom_call.1} parent=1 // loop_header_branch
      %24 = sbr.rel (%p22) target = $region8
    $region5: #{tpu_custom_call.1} parent=1 // loop_body
      %s26 = ssub.s32 %s21, 1
      %s27 = ssub.s32 %s21, 2
      %s34 = sadd.s32 1, %s29
      %p35 = scmp.ge.s32.totalorder %s34, 2
      %s36 = scalar_select %p35, 0, %s34
      %s37 = sadd.s32 1, %s28
      %s38 = scalar_select %p35, %s37, %s28
      %p39 = scmp.ge.s32.totalorder %s38, 1
      %s40 = scalar_select %p39, 0, %s38
      %s41 = ssub.s32 %s28, %s40
      %p42 = scmp.eq.s32.totalorder %s41, 0
      %s44 = sadd.s32 %s43, 1
      %s45 = scalar_select %p42, %s43, %s44
      %p48 = pneg %p42
      %p49 = scmp.eq.s32.totalorder %s21, 1
      %p50 = por %p48, %p49
      %p51 = scmp.ne.s32.totalorder %s43, %s46
      %p52 = scmp.eq.s32.totalorder %s21, 0
      %p53 = por %p51, %p52
      %p54 = scmp.ne.s32.totalorder %s43, %s46
      %p55 = scmp.eq.s32.totalorder %s26, 1
      %p56 = por %p54, %p55
      %p57 = scmp.ne.s32.totalorder %s46, %s47
      %p58 = scmp.eq.s32.totalorder %s26, 0
      %p59 = por %p57, %p58
      %p60 = scmp.ne.s32.totalorder %s46, %s47
      %p61 = scmp.eq.s32.totalorder %s27, 1
      %p62 = por %p60, %p61
      %p64 = scmp.ne.s32.totalorder %s47, %s63
      %p65 = scmp.eq.s32.totalorder %s27, 0
      %p66 = por %p64, %p65
      %s68 = sadd.s32 %s67, 1
      %p71 = scmp.eq.s32.totalorder %s21, 1
      %p72 = scmp.ne.s32.totalorder %s67, %s69
      %p73 = scmp.eq.s32.totalorder %s21, 0
      %p74 = por %p72, %p73
      %p75 = scmp.ne.s32.totalorder %s67, %s69
      %p76 = scmp.eq.s32.totalorder %s26, 1
      %p77 = por %p75, %p76
      %p78 = scmp.ne.s32.totalorder %s69, %s70
      %p79 = scmp.eq.s32.totalorder %s26, 0
      %p80 = por %p78, %p79
      %p81 = scmp.ne.s32.totalorder %s69, %s70
      %p82 = scmp.eq.s32.totalorder %s27, 1
      %p83 = por %p81, %p82
      %p85 = scmp.ne.s32.totalorder %s70, %s84
      %p86 = scmp.eq.s32.totalorder %s27, 0
      %p87 = por %p85, %p86
      %s89 = sadd.s32 %s88, 1
      %p92 = scmp.eq.s32.totalorder %s21, 1
      %p93 = scmp.ne.s32.totalorder %s88, %s90
      %p94 = scmp.eq.s32.totalorder %s21, 0
      %p95 = por %p93, %p94
      %p96 = scmp.ne.s32.totalorder %s88, %s90
      %p97 = scmp.eq.s32.totalorder %s26, 1
      %p98 = por %p96, %p97
      %p99 = scmp.ne.s32.totalorder %s90, %s91
      %p100 = scmp.eq.s32.totalorder %s26, 0
      %p101 = por %p99, %p100
      %p102 = scmp.ne.s32.totalorder %s90, %s91
      %p103 = scmp.eq.s32.totalorder %s27, 1
      %p104 = por %p102, %p103
      %p106 = scmp.ne.s32.totalorder %s91, %s105
      %p107 = scmp.eq.s32.totalorder %s27, 0
      %p108 = por %p106, %p107
      %s110 = sadd.s32 %s109, 1
      %p113 = scmp.eq.s32.totalorder %s21, 1
      %p114 = scmp.ne.s32.totalorder %s109, %s111
      %p115 = scmp.eq.s32.totalorder %s21, 0
      %p116 = por %p114, %p115
      %p117 = scmp.ne.s32.totalorder %s109, %s111
      %p118 = scmp.eq.s32.totalorder %s26, 1
      %p119 = por %p117, %p118
      %p120 = scmp.ne.s32.totalorder %s111, %s112
      %p121 = scmp.eq.s32.totalorder %s26, 0
      %p122 = por %p120, %p121
      %p123 = scmp.ne.s32.totalorder %s111, %s112
      %p124 = scmp.eq.s32.totalorder %s27, 1
      %p125 = por %p123, %p124
      %p127 = scmp.ne.s32.totalorder %s112, %s126
      %p128 = scmp.eq.s32.totalorder %s27, 0
      %p129 = por %p127, %p128
      %s130 = ssub.s32 %s29, %s36
      %p131 = scmp.eq.s32.totalorder %s130, 0
      %s133 = sadd.s32 %s132, 1
      %s134 = scalar_select %p131, %s132, %s133
      %p137 = pneg %p131
      %p138 = scmp.eq.s32.totalorder %s21, 1
      %p139 = por %p137, %p138
      %p140 = scmp.ne.s32.totalorder %s132, %s135
      %p141 = scmp.eq.s32.totalorder %s21, 0
      %p142 = por %p140, %p141
      %p143 = scmp.ne.s32.totalorder %s132, %s135
      %p144 = scmp.eq.s32.totalorder %s26, 1
      %p145 = por %p143, %p144
      %p146 = scmp.ne.s32.totalorder %s135, %s136
      %p147 = scmp.eq.s32.totalorder %s26, 0
      %p148 = por %p146, %p147
      %p149 = scmp.ne.s32.totalorder %s135, %s136
      %p150 = scmp.eq.s32.totalorder %s27, 1
      %p151 = por %p149, %p150
      %p153 = scmp.ne.s32.totalorder %s136, %s152
      %p154 = scmp.eq.s32.totalorder %s27, 0
      %p155 = por %p153, %p154
      %s156 = ssub.s32 %s29, %s36
      %p157 = scmp.eq.s32.totalorder %s156, 0
      %s159 = sadd.s32 %s158, 1
      %s160 = scalar_select %p157, %s158, %s159
      %p163 = pneg %p157
      %p164 = scmp.eq.s32.totalorder %s21, 1
      %p165 = por %p163, %p164
      %p166 = scmp.ne.s32.totalorder %s158, %s161
      %p167 = scmp.eq.s32.totalorder %s21, 0
      %p168 = por %p166, %p167
      %p169 = scmp.ne.s32.totalorder %s158, %s161
      %p170 = scmp.eq.s32.totalorder %s26, 1
      %p171 = por %p169, %p170
      %p172 = scmp.ne.s32.totalorder %s161, %s162
      %p173 = scmp.eq.s32.totalorder %s26, 0
      %p174 = por %p172, %p173
      %p175 = scmp.ne.s32.totalorder %s161, %s162
      %p176 = scmp.eq.s32.totalorder %s27, 1
      %p177 = por %p175, %p176
      %p179 = scmp.ne.s32.totalorder %s162, %s178
      %p180 = scmp.eq.s32.totalorder %s27, 0
      %p181 = por %p179, %p180
      %s182 = ssub.s32 %s29, %s36
      %p183 = scmp.eq.s32.totalorder %s182, 0
      %s185 = sadd.s32 %s184, 1
      %s186 = scalar_select %p183, %s184, %s185
      %p189 = pneg %p183
      %p190 = scmp.eq.s32.totalorder %s21, 1
      %p191 = por %p189, %p190
      %p192 = scmp.ne.s32.totalorder %s184, %s187
      %p193 = scmp.eq.s32.totalorder %s21, 0
      %p194 = por %p192, %p193
      %p195 = scmp.ne.s32.totalorder %s184, %s187
      %p196 = scmp.eq.s32.totalorder %s26, 1
      %p197 = por %p195, %p196
      %p198 = scmp.ne.s32.totalorder %s187, %s188
      %p199 = scmp.eq.s32.totalorder %s26, 0
      %p200 = por %p198, %p199
      %p201 = scmp.ne.s32.totalorder %s187, %s188
      %p202 = scmp.eq.s32.totalorder %s27, 1
      %p203 = por %p201, %p202
      %p205 = scmp.ne.s32.totalorder %s188, %s204
      %p206 = scmp.eq.s32.totalorder %s27, 0
      %p207 = por %p205, %p206
      %s208 = ssub.s32 %s29, %s36
      %p209 = scmp.eq.s32.totalorder %s208, 0
      %s211 = sadd.s32 %s210, 1
      %s212 = scalar_select %p209, %s210, %s211
      %p215 = pneg %p209
      %p216 = scmp.eq.s32.totalorder %s21, 1
      %p217 = por %p215, %p216
      %p218 = scmp.ne.s32.totalorder %s210, %s213
      %p219 = scmp.eq.s32.totalorder %s21, 0
      %p220 = por %p218, %p219
      %p221 = scmp.ne.s32.totalorder %s210, %s213
      %p222 = scmp.eq.s32.totalorder %s26, 1
      %p223 = por %p221, %p222
      %p224 = scmp.ne.s32.totalorder %s213, %s214
      %p225 = scmp.eq.s32.totalorder %s26, 0
      %p226 = por %p224, %p225
      %p227 = scmp.ne.s32.totalorder %s213, %s214
      %p228 = scmp.eq.s32.totalorder %s27, 1
      %p229 = por %p227, %p228
      %p231 = scmp.ne.s32.totalorder %s214, %s230
      %p232 = scmp.eq.s32.totalorder %s27, 0
      %p233 = por %p231, %p232
      %s234 = ssub.s32 %s29, %s36
      %p235 = scmp.eq.s32.totalorder %s234, 0
      %s237 = sadd.s32 %s236, 1
      %s238 = scalar_select %p235, %s236, %s237
      %p241 = pneg %p235
      %p242 = scmp.eq.s32.totalorder %s21, 1
      %p243 = por %p241, %p242
      %p244 = scmp.ne.s32.totalorder %s236, %s239
      %p245 = scmp.eq.s32.totalorder %s21, 0
      %p246 = por %p244, %p245
      %p247 = scmp.ne.s32.totalorder %s236, %s239
      %p248 = scmp.eq.s32.totalorder %s26, 1
      %p249 = por %p247, %p248
      %p250 = scmp.ne.s32.totalorder %s239, %s240
      %p251 = scmp.eq.s32.totalorder %s26, 0
      %p252 = por %p250, %p251
      %p253 = scmp.ne.s32.totalorder %s239, %s240
      %p254 = scmp.eq.s32.totalorder %s27, 1
      %p255 = por %p253, %p254
      %p257 = scmp.ne.s32.totalorder %s240, %s256
      %p258 = scmp.eq.s32.totalorder %s27, 0
      %p259 = por %p257, %p258
      %s260 = ssub.s32 %s29, %s36
      %p261 = scmp.eq.s32.totalorder %s260, 0
      %s263 = sadd.s32 %s262, 1
      %s264 = scalar_select %p261, %s262, %s263
      %p267 = pneg %p261
      %p268 = scmp.eq.s32.totalorder %s21, 1
      %p269 = por %p267, %p268
      %p270 = scmp.ne.s32.totalorder %s262, %s265
      %p271 = scmp.eq.s32.totalorder %s21, 0
      %p272 = por %p270, %p271
      %p273 = scmp.ne.s32.totalorder %s262, %s265
      %p274 = scmp.eq.s32.totalorder %s26, 1
      %p275 = por %p273, %p274
      %p276 = scmp.ne.s32.totalorder %s265, %s266
      %p277 = scmp.eq.s32.totalorder %s26, 0
      %p278 = por %p276, %p277
      %p279 = scmp.ne.s32.totalorder %s265, %s266
      %p280 = scmp.eq.s32.totalorder %s27, 1
      %p281 = por %p279, %p280
      %p283 = scmp.ne.s32.totalorder %s266, %s282
      %p284 = scmp.eq.s32.totalorder %s27, 0
      %p285 = por %p283, %p284
      %s286 = ssub.s32 %s29, %s36
      %p287 = scmp.eq.s32.totalorder %s286, 0
      %s289 = sadd.s32 %s288, 1
      %s290 = scalar_select %p287, %s288, %s289
      %p293 = pneg %p287
      %p294 = scmp.eq.s32.totalorder %s21, 1
      %p295 = por %p293, %p294
      %p296 = scmp.ne.s32.totalorder %s288, %s291
      %p297 = scmp.eq.s32.totalorder %s21, 0
      %p298 = por %p296, %p297
      %p299 = scmp.ne.s32.totalorder %s288, %s291
      %p300 = scmp.eq.s32.totalorder %s26, 1
      %p301 = por %p299, %p300
      %p302 = scmp.ne.s32.totalorder %s291, %s292
      %p303 = scmp.eq.s32.totalorder %s26, 0
      %p304 = por %p302, %p303
      %p305 = scmp.ne.s32.totalorder %s291, %s292
      %p306 = scmp.eq.s32.totalorder %s27, 1
      %p307 = por %p305, %p306
      %p309 = scmp.ne.s32.totalorder %s292, %s308
      %p310 = scmp.eq.s32.totalorder %s27, 0
      %p311 = por %p309, %p310
      %s312 = ssub.s32 %s29, %s36
      %p313 = scmp.eq.s32.totalorder %s312, 0
      %s315 = sadd.s32 %s314, 1
      %s316 = scalar_select %p313, %s314, %s315
      %p319 = pneg %p313
      %p320 = scmp.eq.s32.totalorder %s21, 1
      %p321 = por %p319, %p320
      %p322 = scmp.ne.s32.totalorder %s314, %s317
      %p323 = scmp.eq.s32.totalorder %s21, 0
      %p324 = por %p322, %p323
      %p325 = scmp.ne.s32.totalorder %s314, %s317
      %p326 = scmp.eq.s32.totalorder %s26, 1
      %p327 = por %p325, %p326
      %p328 = scmp.ne.s32.totalorder %s317, %s318
      %p329 = scmp.eq.s32.totalorder %s26, 0
      %p330 = por %p328, %p329
      %p331 = scmp.ne.s32.totalorder %s317, %s318
      %p332 = scmp.eq.s32.totalorder %s27, 1
      %p333 = por %p331, %p332
      %p335 = scmp.ne.s32.totalorder %s318, %s334
      %p336 = scmp.eq.s32.totalorder %s27, 0
      %p337 = por %p335, %p336
      %s338 = ssub.s32 %s28, %s40
      %p339 = scmp.eq.s32.totalorder %s338, 0
      %s341 = sadd.s32 %s340, 1
      %s342 = scalar_select %p339, %s340, %s341
      %p345 = pneg %p339
      %p346 = scmp.eq.s32.totalorder %s21, 1
      %p347 = por %p345, %p346
      %p348 = scmp.ne.s32.totalorder %s340, %s343
      %p349 = scmp.eq.s32.totalorder %s21, 0
      %p350 = por %p348, %p349
      %p351 = scmp.ne.s32.totalorder %s340, %s343
      %p352 = scmp.eq.s32.totalorder %s26, 1
      %p353 = por %p351, %p352
      %p354 = scmp.ne.s32.totalorder %s343, %s344
      %p355 = scmp.eq.s32.totalorder %s26, 0
      %p356 = por %p354, %p355
      %p357 = scmp.ne.s32.totalorder %s343, %s344
      %p358 = scmp.eq.s32.totalorder %s27, 1
      %p359 = por %p357, %p358
      %p361 = scmp.ne.s32.totalorder %s344, %s360
      %p362 = scmp.eq.s32.totalorder %s27, 0
      %p363 = por %p361, %p362
      %p364 = scmp.le.s32.totalorder 1, %s21
      %p365 = scmp.lt.s32.totalorder %s21, 3
      %p366 = pnand %p364, %p365
      %p367 = pneg %p366
      // Predicated region
      $region9: #{tpu_custom_call.1} parent=5 // pred_check
        _
      $region10: #{tpu_custom_call.1} parent=5 // pred_check_branch
        %369 = sbr.rel (%p366) target = $region12
      $region11: #{tpu_custom_call.1} parent=5 // pred_region
        %s370 = ssub.s32 %s21, 1
        // Predicated region
        $region13: #{tpu_custom_call.1} parent=11 // pred_check
          %p371 = pneg %p59
        $region14: #{tpu_custom_call.1} parent=11 // pred_check_branch
          %373 = sbr.rel (%p371) target = $region16
        $region15: #{tpu_custom_call.1} parent=11 // pred_region
          %s374 = smul.u32 2, %s30
          %p375 = scmp.lt.s32.totalorder %s374, 1
          %s376 = scalar_select %p375, %s374, 1
          %s377 = smul.addr %s376, 8
          %s378 = scalar_lea.vmem %s0, %s377
          %s379 = smul.u32 2, %s30
        $region16: #{tpu_custom_call.1} parent=11 // pred_fallthru
          _
        // Predicated region
        $region17: #{tpu_custom_call.1} parent=11 // pred_check
          %p380 = pneg %p80
        $region18: #{tpu_custom_call.1} parent=11 // pred_check_branch
          %382 = sbr.rel (%p380) target = $region20
        $region19: #{tpu_custom_call.1} parent=11 // pred_region
          %s384 = ssub.s32 128, 128
          %385 = vsyncadd [#allocation4], %s384
          %s386 = sshll.u32 [#allocation3], 4
          %s387 = int_to_ptr.vmem [resolvable:$true] %s386
          %392 = dma.hbm_to_vmem [thread:$0]  %s1, 128, %s387, [#allocation4], 64, 64, 4
        $region20: #{tpu_custom_call.1} parent=11 // pred_fallthru
          _
        // Predicated region
        $region21: #{tpu_custom_call.1} parent=11 // pred_check
          %p393 = pneg %p101
        $region22: #{tpu_custom_call.1} parent=11 // pred_check_branch
          %395 = sbr.rel (%p393) target = $region24
        $region23: #{tpu_custom_call.1} parent=11 // pred_region
          _
        $region24: #{tpu_custom_call.1} parent=11 // pred_fallthru
          _
        // Predicated region
        $region25: #{tpu_custom_call.1} parent=11 // pred_check
          %p396 = pneg %p122
        $region26: #{tpu_custom_call.1} parent=11 // pred_check_branch
          %398 = sbr.rel (%p396) target = $region28
        $region27: #{tpu_custom_call.1} parent=11 // pred_region
          %s400 = ssub.s32 128, 128
          %401 = vsyncadd [#allocation7], %s400
          %s403 = sshll.u32 [#allocation6], 4
          %s404 = int_to_ptr.vmem [resolvable:$true] %s403
          %406 = dma.hbm_to_vmem [thread:$0]  %s3, 128, %s404, [#allocation7]
        $region28: #{tpu_custom_call.1} parent=11 // pred_fallthru
          _
      $region12: #{tpu_custom_call.1} parent=5 // pred_fallthru
        _
      %p407 = scmp.lt.s32.totalorder %s21, 2
      // Predicated region
      $region29: #{tpu_custom_call.1} parent=5 // pred_check
        %p408 = pneg %p407
      $region30: #{tpu_custom_call.1} parent=5 // pred_check_branch
        %410 = sbr.rel (%p408) target = $region32
      $region31: #{tpu_custom_call.1} parent=5 // pred_region
        // Predicated region
        $region33: #{tpu_custom_call.1} parent=31 // pred_check
          %p411 = pneg %p142
        $region34: #{tpu_custom_call.1} parent=31 // pred_check_branch
          %413 = sbr.rel (%p411) target = $region36
        $region35: #{tpu_custom_call.1} parent=31 // pred_region
          %p414 = scmp.lt.s32.totalorder %s29, 1
          %s415 = scalar_select %p414, %s29, 1
          %s416 = smul.addr %s415, 4
          %s417 = smul.addr %s416, 4
          %s418 = scalar_lea.vmem %s4, %s417
        $region36: #{tpu_custom_call.1} parent=31 // pred_fallthru
          _
        // Predicated region
        $region37: #{tpu_custom_call.1} parent=31 // pred_check
          %p419 = pneg %p168
        $region38: #{tpu_custom_call.1} parent=31 // pred_check_branch
          %421 = sbr.rel (%p419) target = $region40
        $region39: #{tpu_custom_call.1} parent=31 // pred_region
          %p422 = scmp.lt.s32.totalorder %s29, 1
          %s423 = scalar_select %p422, %s29, 1
          %s424 = scalar_lea.vmem %s5, %s423
        $region40: #{tpu_custom_call.1} parent=31 // pred_fallthru
          _
        // Predicated region
        $region41: #{tpu_custom_call.1} parent=31 // pred_check
          %p425 = pneg %p194
        $region42: #{tpu_custom_call.1} parent=31 // pred_check_branch
          %427 = sbr.rel (%p425) target = $region44
        $region43: #{tpu_custom_call.1} parent=31 // pred_region
          %p428 = scmp.lt.s32.totalorder %s29, 1
          %s429 = scalar_select %p428, %s29, 1
          %s430 = smul.addr %s429, 2
          %s431 = smul.addr %s430, 4
          %s432 = scalar_lea.vmem %s6, %s431
        $region44: #{tpu_custom_call.1} parent=31 // pred_fallthru
          _
        // Predicated region
        $region45: #{tpu_custom_call.1} parent=31 // pred_check
          %p433 = pneg %p220
        $region46: #{tpu_custom_call.1} parent=31 // pred_check_branch
          %435 = sbr.rel (%p433) target = $region48
        $region47: #{tpu_custom_call.1} parent=31 // pred_region
          %p436 = scmp.lt.s32.totalorder %s29, 1
          %s437 = scalar_select %p436, %s29, 1
          %s438 = scalar_lea.vmem %s7, %s437
        $region48: #{tpu_custom_call.1} parent=31 // pred_fallthru
          _
        // Predicated region
        $region49: #{tpu_custom_call.1} parent=31 // pred_check
          %p439 = pneg %p246
        $region50: #{tpu_custom_call.1} parent=31 // pred_check_branch
          %441 = sbr.rel (%p439) target = $region52
        $region51: #{tpu_custom_call.1} parent=31 // pred_region
          %p442 = scmp.lt.s32.totalorder %s29, 1
          %s443 = scalar_select %p442, %s29, 1
          %s444 = smul.addr %s443, 4
          %s445 = smul.addr %s444, 4
          %s446 = scalar_lea.vmem %s8, %s445
        $region52: #{tpu_custom_call.1} parent=31 // pred_fallthru
          _
        // Predicated region
        $region53: #{tpu_custom_call.1} parent=31 // pred_check
          %p447 = pneg %p272
        $region54: #{tpu_custom_call.1} parent=31 // pred_check_branch
          %449 = sbr.rel (%p447) target = $region56
        $region55: #{tpu_custom_call.1} parent=31 // pred_region
          %s450 = sand.u32 %s21, 1
          %s451 = scalar_lea.sflag [#allocation4], %s450
          %s452 = sand.u32 %s262, 1
          %s453 = scalar_lea.vmem [#allocation8], %s452
          %s455 = ssub.s32 16, 16
          %456 = vsyncadd %s451, %s455
          %s457 = smul.addr %s29, 16
          %s458 = scalar_lea.hbm %s9, %s457
          %s460 = sshll.u32 %s453, 4
          %s461 = int_to_ptr.vmem [resolvable:$true] %s460
          %463 = dma.hbm_to_vmem [thread:$0]  %s458, 16, %s461, %s451
        $region56: #{tpu_custom_call.1} parent=31 // pred_fallthru
          _
        // Predicated region
        $region57: #{tpu_custom_call.1} parent=31 // pred_check
          %p464 = pneg %p298
        $region58: #{tpu_custom_call.1} parent=31 // pred_check_branch
          %466 = sbr.rel (%p464) target = $region60
        $region59: #{tpu_custom_call.1} parent=31 // pred_region
          %p467 = scmp.lt.s32.totalorder %s29, 1
          %s468 = scalar_select %p467, %s29, 1
          %s469 = smul.addr %s468, 8
          %s470 = smul.addr %s469, 4
          %s471 = scalar_lea.vmem %s10, %s470
        $region60: #{tpu_custom_call.1} parent=31 // pred_fallthru
          _
        // Predicated region
        $region61: #{tpu_custom_call.1} parent=31 // pred_check
          %p472 = pneg %p324
        $region62: #{tpu_custom_call.1} parent=31 // pred_check_branch
          %474 = sbr.rel (%p472) target = $region64
        $region63: #{tpu_custom_call.1} parent=31 // pred_region
          %p475 = scmp.lt.s32.totalorder %s29, 1
          %s476 = scalar_select %p475, %s29, 1
          %s477 = scalar_lea.vmem %s11, %s476
        $region64: #{tpu_custom_call.1} parent=31 // pred_fallthru
          _
      $region32: #{tpu_custom_call.1} parent=5 // pred_fallthru
        _
      %p478 = scmp.le.s32.totalorder 1, %s21
      %p479 = scmp.lt.s32.totalorder %s21, 3
      %p480 = pnand %p478, %p479
      %p481 = pneg %p480
      // Predicated region
      $region65: #{tpu_custom_call.1} parent=5 // pred_check
        _
      $region66: #{tpu_custom_call.1} parent=5 // pred_check_branch
        %483 = sbr.rel (%p480) target = $region68
      $region67: #{tpu_custom_call.1} parent=5 // pred_region
        %s484 = ssub.s32 %s21, 1
        // Predicated region
        $region69: #{tpu_custom_call.1} parent=67 // pred_check
          %p485 = pneg %p80
        $region70: #{tpu_custom_call.1} parent=67 // pred_check_branch
          %487 = sbr.rel (%p485) target = $region72
        $region71: #{tpu_custom_call.1} parent=67 // pred_region
          %488 = dma.done [#allocation4], 128
        $region72: #{tpu_custom_call.1} parent=67 // pred_fallthru
          _
        // Predicated region
        $region73: #{tpu_custom_call.1} parent=67 // pred_check
          %p489 = pneg %p122
        $region74: #{tpu_custom_call.1} parent=67 // pred_check_branch
          %491 = sbr.rel (%p489) target = $region76
        $region75: #{tpu_custom_call.1} parent=67 // pred_region
          %492 = dma.done [#allocation7], 128
        $region76: #{tpu_custom_call.1} parent=67 // pred_fallthru
          _
        %s493 = sand.u32 %s26, 1
        %s494 = scalar_lea.sflag [#allocation4], %s493
        %s495 = sand.u32 %s265, 1
        %s496 = scalar_lea.vmem [#allocation8], %s495
        // Predicated region
        $region77: #{tpu_custom_call.1} parent=67 // pred_check
          %p497 = pneg %p278
        $region78: #{tpu_custom_call.1} parent=67 // pred_check_branch
          %499 = sbr.rel (%p497) target = $region80
        $region79: #{tpu_custom_call.1} parent=67 // pred_region
          %500 = dma.done %s494, 16
        $region80: #{tpu_custom_call.1} parent=67 // pred_fallthru
          _
        %s501 = smul.u32 2, %s30
        %p502 = scmp.lt.s32.totalorder %s501, 1
        %s503 = scalar_select %p502, %s501, 1
        %s504 = smul.addr %s503, 8
        %s505 = scalar_lea.vmem %s0, %s504
        %p506 = pneg %p59
        %p507 = pneg %p56
        %p508 = pneg %p80
        %p509 = pneg %p77
        %p510 = pneg %p101
        %p511 = pneg %p98
        %p512 = pneg %p122
        %p513 = pneg %p119
        %p514 = scmp.lt.s32.totalorder %s31, 1
        %s515 = scalar_select %p514, %s31, 1
        %s516 = smul.addr %s515, 4
        %s517 = smul.addr %s516, 4
        %s518 = scalar_lea.vmem %s4, %s517
        %p519 = pneg %p148
        %p520 = pneg %p145
        %p521 = scmp.lt.s32.totalorder %s31, 1
        %s522 = scalar_select %p521, %s31, 1
        %s523 = scalar_lea.vmem %s5, %s522
        %p524 = pneg %p174
        %p525 = pneg %p171
        %p526 = scmp.lt.s32.totalorder %s31, 1
        %s527 = scalar_select %p526, %s31, 1
        %s528 = smul.addr %s527, 2
        %s529 = smul.addr %s528, 4
        %s530 = scalar_lea.vmem %s6, %s529
        %p531 = pneg %p200
        %p532 = pneg %p197
        %p533 = scmp.lt.s32.totalorder %s31, 1
        %s534 = scalar_select %p533, %s31, 1
        %s535 = scalar_lea.vmem %s7, %s534
        %p536 = pneg %p226
        %p537 = pneg %p223
        %p538 = scmp.lt.s32.totalorder %s31, 1
        %s539 = scalar_select %p538, %s31, 1
        %s540 = smul.addr %s539, 4
        %s541 = smul.addr %s540, 4
        %s542 = scalar_lea.vmem %s8, %s541
        %p543 = pneg %p252
        %p544 = pneg %p249
        %s545 = sand.u32 %s26, 1
        %s546 = scalar_lea.sflag [#allocation4], %s545
        %s547 = sand.u32 %s265, 1
        %s548 = scalar_lea.vmem [#allocation8], %s547
        %p549 = pneg %p278
        %p550 = pneg %p275
        %p551 = scmp.lt.s32.totalorder %s31, 1
        %s552 = scalar_select %p551, %s31, 1
        %s553 = smul.addr %s552, 8
        %s554 = smul.addr %s553, 4
        %s555 = scalar_lea.vmem %s10, %s554
        %p556 = pneg %p304
        %p557 = pneg %p301
        %p558 = scmp.lt.s32.totalorder %s31, 1
        %s559 = scalar_select %p558, %s31, 1
        %s560 = scalar_lea.vmem %s11, %s559
        %p561 = pneg %p330
        %p562 = pneg %p327
        %p563 = pneg %p356
        %p564 = pneg %p353
        %s565 = smul.u32 2, %s30
        %p566 = scmp.lt.s32.totalorder %s565, 1
        %s567 = scalar_select %p566, %s565, 1
        %s568 = smul.addr %s567, 8
        %s569 = scalar_lea.vmem %s0, %s568
        %s570 = smul.u32 2, %s30
        %p571 = scmp.lt.s32.totalorder %s31, 1
        %s572 = scalar_select %p571, %s31, 1
        %s573 = smul.addr %s572, 4
        %s574 = smul.addr %s573, 4
        %s575 = scalar_lea.vmem %s4, %s574
        %p576 = scmp.lt.s32.totalorder %s31, 1
        %s577 = scalar_select %p576, %s31, 1
        %s578 = scalar_lea.vmem %s5, %s577
        %p579 = scmp.lt.s32.totalorder %s31, 1
        %s580 = scalar_select %p579, %s31, 1
        %s581 = smul.addr %s580, 2
        %s582 = smul.addr %s581, 4
        %s583 = scalar_lea.vmem %s6, %s582
        %p584 = scmp.lt.s32.totalorder %s31, 1
        %s585 = scalar_select %p584, %s31, 1
        %s586 = scalar_lea.vmem %s7, %s585
        %p587 = scmp.lt.s32.totalorder %s31, 1
        %s588 = scalar_select %p587, %s31, 1
        %s589 = smul.addr %s588, 4
        %s590 = smul.addr %s589, 4
        %s591 = scalar_lea.vmem %s8, %s590
        %p592 = scmp.lt.s32.totalorder %s31, 1
        %s593 = scalar_select %p592, %s31, 1
        %s594 = smul.addr %s593, 8
        %s595 = smul.addr %s594, 4
        %s596 = scalar_lea.vmem %s10, %s595
        %p597 = scmp.lt.s32.totalorder %s31, 1
        %s598 = scalar_select %p597, %s31, 1
        %s599 = scalar_lea.vmem %s11, %s598
        %s600 = smul.u32 2, %s30
        %p602 = scmp.eq.s32.totalorder %s31, 0
        // Predicated region
        $region81: #{tpu_custom_call.1} parent=67 // pred_check
          %p603 = pneg %p602
        $region82: #{tpu_custom_call.1} parent=67 // pred_check_branch
          %605 = sbr.rel (%p603) target = $region84
        $region83: #{tpu_custom_call.1} parent=67 // pred_region
          %v606 = vld [vmem:[%s569] sm:$0xff]
          %v607 = vld [vmem:[%s569 + $0x8] sm:$0xff]
          %v608 = vpack.c.bf16 %v607, %v606
          %v609 = vld [vmem:[#allocation3] sm:$0xf]
          %v610 = vld [vmem:[#allocation3 + $0x4] sm:$0xf]
          %v611 = vld [vmem:[%s2] sm:$0x1]
          %v613 = vlaneseq
          %v614 = vshrl.u32 %v613, 7
          %v615 = vsub.s32 0, %v614
          %v616 = vrot.slane %v611, %v615
          %v620 = vunpack.c.l.b16 %v609
          %v621 = vunpack.c.l.b16 %v610
          %v622 = vpack.c.b16 %v621, %v620
          %vm624 = vcmask 130048
          %v626 = vsel %vm624, %v608, 0
          %628 = vmatprep.subr.bf16.mxu0 0
          %629 = vmatpush1.bf16.msra.mxu0 %v622
          %630 = vmatprep.subr.bf16.mxu0 0
          %631 = vmatpush1.bf16.msra.mxu0 0
          %632 = vmatprep.subr.bf16.mxu0 0
          %633 = vmatpush1.bf16.msra.mxu0 0
          %634 = vmatprep.subr.bf16.mxu0 0
          %635 = vmatpush1.bf16.msra.mxu0 0
          %636 = vmatprep.subr.bf16.mxu0 0
          %637 = vmatpush1.bf16.msra.mxu0 0
          %638 = vmatprep.subr.bf16.mxu0 0
          %639 = vmatpush1.bf16.msra.mxu0 0
          %640 = vmatprep.subr.bf16.mxu0 0
          %641 = vmatpush1.bf16.msra.mxu0 0
          %642 = vmatprep.subr.bf16.mxu0 0
          %643 = vmatpush1.bf16.msra.mxu0 0
          %644 = vmatprep.subr.bf16.mxu0 0
          %645 = vmatpush1.bf16.msra.mxu0 0
          %646 = vmatprep.subr.bf16.mxu0 0
          %647 = vmatpush1.bf16.msra.mxu0 0
          %648 = vmatprep.subr.bf16.mxu0 0
          %649 = vmatpush1.bf16.msra.mxu0 0
          %650 = vmatprep.subr.bf16.mxu0 0
          %651 = vmatpush1.bf16.msra.mxu0 0
          %652 = vmatprep.subr.bf16.mxu0 0
          %653 = vmatpush1.bf16.msra.mxu0 0
          %654 = vmatprep.subr.bf16.mxu0 0
          %655 = vmatpush1.bf16.msra.mxu0 0
          %656 = vmatprep.subr.bf16.mxu0 0
          %657 = vmatpush1.bf16.msra.mxu0 0
          %658 = vmatprep.subr.bf16.mxu0 0
          %659 = vmatpush1.bf16.msra.mxu0 0
          %660 = vmatprep.mubr.bf16.mxu0 0
          %661 = vmatmul.mubr.bf16.gmra.mrb[0].mxu0 %v626
          %v662 = vpop.f32.mrb[0].mxu0
          %v663 = vadd.f32 %v616, %v662
          %v664 = vpop.f32.mrb[0].mxu0
          %v665 = vpop.f32.mrb[0].mxu0
          %v666 = vadd.f32 %v616, %v665
          %v667 = vpop.f32.mrb[0].mxu0
          %668 = vdwg.mxu0
          %v669 = vld [vmem:[#allocation6] sm:$0xff]
          %v670 = vadd.f32 %v663, %v669
          %v671 = vadd.f32 %v666, %v669
          %vm672 = vcmask 261120
          %673 = vst.msk [vmem:[#allocation2] sm:$0xff] %vm672, %v670
          %674 = vst.msk [vmem:[#allocation2 + $0x8] sm:$0xff] %vm672, %v671
        $region84: #{tpu_custom_call.1} parent=67 // pred_fallthru
          _
        %v675 = vld [vmem:[#allocation2] sm:$0xff]
        %v676 = vld [vmem:[#allocation2 + $0x8] sm:$0xff]
        %v677 = vpack.c.bf16 %v676, %v675
        %v678 = vld [vmem:[%s575] sm:$0xf]
        %v679 = vld [vmem:[%s575 + $0x4] sm:$0xf]
        %v680 = vld [vmem:[%s575 + $0x8] sm:$0xf]
        %v681 = vld [vmem:[%s575 + $0xc] sm:$0xf]
        %v682 = vld [vmem:[%s578] sm:$0x1]
        %v684 = vlaneseq
        %v685 = vshrl.u32 %v684, 7
        %v686 = vsub.s32 0, %v685
        %v687 = vrot.slane %v682, %v686
        %v693 = vunpack.c.l.b16 %v678
        %v694 = vunpack.c.l.b16 %v679
        %v695 = vunpack.c.l.b16 %v680
        %v696 = vunpack.c.l.b16 %v681
        %v697 = vpack.c.b16 %v694, %v693
        %v698 = vpack.c.b16 %v696, %v695
        %vm701 = vcmask 261120
        %v703 = vsel %vm701, %v677, 0
        %705 = vmatprep.subr.bf16.mxu0 0
        %706 = vmatpush1.bf16.msra.mxu0 %v697
        %707 = vmatprep.subr.bf16.mxu0 0
        %708 = vmatpush1.bf16.msra.mxu0 %v698
        %709 = vmatprep.subr.bf16.mxu0 0
        %710 = vmatpush1.bf16.msra.mxu0 0
        %711 = vmatprep.subr.bf16.mxu0 0
        %712 = vmatpush1.bf16.msra.mxu0 0
        %713 = vmatprep.subr.bf16.mxu0 0
        %714 = vmatpush1.bf16.msra.mxu0 0
        %715 = vmatprep.subr.bf16.mxu0 0
        %716 = vmatpush1.bf16.msra.mxu0 0
        %717 = vmatprep.subr.bf16.mxu0 0
        %718 = vmatpush1.bf16.msra.mxu0 0
        %719 = vmatprep.subr.bf16.mxu0 0
        %720 = vmatpush1.bf16.msra.mxu0 0
        %721 = vmatprep.subr.bf16.mxu0 0
        %722 = vmatpush1.bf16.msra.mxu0 0
        %723 = vmatprep.subr.bf16.mxu0 0
        %724 = vmatpush1.bf16.msra.mxu0 0
        %725 = vmatprep.subr.bf16.mxu0 0
        %726 = vmatpush1.bf16.msra.mxu0 0
        %727 = vmatprep.subr.bf16.mxu0 0
        %728 = vmatpush1.bf16.msra.mxu0 0
        %729 = vmatprep.subr.bf16.mxu0 0
        %730 = vmatpush1.bf16.msra.mxu0 0
        %731 = vmatprep.subr.bf16.mxu0 0
        %732 = vmatpush1.bf16.msra.mxu0 0
        %733 = vmatprep.subr.bf16.mxu0 0
        %734 = vmatpush1.bf16.msra.mxu0 0
        %735 = vmatprep.subr.bf16.mxu0 0
        %736 = vmatpush1.bf16.msra.mxu0 0
        %737 = vmatprep.mubr.bf16.mxu0 0
        %738 = vmatmul.mubr.bf16.gmra.mrb[0].mxu0 %v703
        %v739 = vpop.f32.mrb[0].mxu0
        %v740 = vadd.f32 %v687, %v739
        %v741 = vpop.f32.mrb[0].mxu0
        %v742 = vpop.f32.mrb[0].mxu0
        %v743 = vadd.f32 %v687, %v742
        %v744 = vpop.f32.mrb[0].mxu0
        %745 = vdwg.mxu0
        %v746 = vpack.c.bf16 %v740, %v740
        %v747 = vpack.c.bf16 %v743, %v743
        %749 = vrot.lane.b32.xlu0 %v746, 112
        %v750 = vpop.permute.xlu0 %749
        %vm751 = vcmask 64512
        %v753 = vsel %vm751, %v746, 0
        %v756 = vsel %vm751, %v750, 0
        %758 = vmatprep.subr.bf16.mxu0 0
        %759 = vmatpush1.bf16.xpose.msra.mxu0 %v756
        %760 = vmatprep.subr.bf16.mxu0 0
        %761 = vmatpush1.bf16.xpose.msra.mxu0 0
        %762 = vmatprep.subr.bf16.mxu0 0
        %763 = vmatpush1.bf16.xpose.msra.mxu0 0
        %764 = vmatprep.subr.bf16.mxu0 0
        %765 = vmatpush1.bf16.xpose.msra.mxu0 0
        %766 = vmatprep.subr.bf16.mxu0 0
        %767 = vmatpush1.bf16.xpose.msra.mxu0 0
        %768 = vmatprep.subr.bf16.mxu0 0
        %769 = vmatpush1.bf16.xpose.msra.mxu0 0
        %770 = vmatprep.subr.bf16.mxu0 0
        %771 = vmatpush1.bf16.xpose.msra.mxu0 0
        %772 = vmatprep.subr.bf16.mxu0 0
        %773 = vmatpush1.bf16.xpose.msra.mxu0 0
        %774 = vmatprep.subr.bf16.mxu0 0
        %775 = vmatpush1.bf16.xpose.msra.mxu0 0
        %776 = vmatprep.subr.bf16.mxu0 0
        %777 = vmatpush1.bf16.xpose.msra.mxu0 0
        %778 = vmatprep.subr.bf16.mxu0 0
        %779 = vmatpush1.bf16.xpose.msra.mxu0 0
        %780 = vmatprep.subr.bf16.mxu0 0
        %781 = vmatpush1.bf16.xpose.msra.mxu0 0
        %782 = vmatprep.subr.bf16.mxu0 0
        %783 = vmatpush1.bf16.xpose.msra.mxu0 0
        %784 = vmatprep.subr.bf16.mxu0 0
        %785 = vmatpush1.bf16.xpose.msra.mxu0 0
        %786 = vmatprep.subr.bf16.mxu0 0
        %787 = vmatpush1.bf16.xpose.msra.mxu0 0
        %788 = vmatprep.subr.bf16.mxu0 0
        %789 = vmatpush1.bf16.xpose.msra.mxu0 0
        %790 = vmatprep.mubr.bf16.mxu0 0
        %791 = vmatmul.mubr.bf16.gmra.mrb[0].mxu0 %v753
        %v792 = vpop.f32.mrb[0].mxu0
        %v793 = vadd.f32 0.0, %v792
        %v794 = vpop.f32.mrb[0].mxu0
        %v795 = vpop.f32.mrb[0].mxu0
        %v796 = vpop.f32.mrb[0].mxu0
        %797 = vdwg.mxu0
        %799 = vrot.lane.b32.xlu0 %v747, 112
        %v800 = vpop.permute.xlu0 %799
        %v802 = vsel %vm751, %v747, 0
        %v805 = vsel %vm751, %v800, 0
        %807 = vmatprep.subr.bf16.mxu0 0
        %808 = vmatpush1.bf16.xpose.msra.mxu0 %v805
        %809 = vmatprep.subr.bf16.mxu0 0
        %810 = vmatpush1.bf16.xpose.msra.mxu0 0
        %811 = vmatprep.subr.bf16.mxu0 0
        %812 = vmatpush1.bf16.xpose.msra.mxu0 0
        %813 = vmatprep.subr.bf16.mxu0 0
        %814 = vmatpush1.bf16.xpose.msra.mxu0 0
        %815 = vmatprep.subr.bf16.mxu0 0
        %816 = vmatpush1.bf16.xpose.msra.mxu0 0
        %817 = vmatprep.subr.bf16.mxu0 0
        %818 = vmatpush1.bf16.xpose.msra.mxu0 0
        %819 = vmatprep.subr.bf16.mxu0 0
        %820 = vmatpush1.bf16.xpose.msra.mxu0 0
        %821 = vmatprep.subr.bf16.mxu0 0
        %822 = vmatpush1.bf16.xpose.msra.mxu0 0
        %823 = vmatprep.subr.bf16.mxu0 0
        %824 = vmatpush1.bf16.xpose.msra.mxu0 0
        %825 = vmatprep.subr.bf16.mxu0 0
        %826 = vmatpush1.bf16.xpose.msra.mxu0 0
        %827 = vmatprep.subr.bf16.mxu0 0
        %828 = vmatpush1.bf16.xpose.msra.mxu0 0
        %829 = vmatprep.subr.bf16.mxu0 0
        %830 = vmatpush1.bf16.xpose.msra.mxu0 0
        %831 = vmatprep.subr.bf16.mxu0 0
        %832 = vmatpush1.bf16.xpose.msra.mxu0 0
        %833 = vmatprep.subr.bf16.mxu0 0
        %834 = vmatpush1.bf16.xpose.msra.mxu0 0
        %835 = vmatprep.subr.bf16.mxu0 0
        %836 = vmatpush1.bf16.xpose.msra.mxu0 0
        %837 = vmatprep.subr.bf16.mxu0 0
        %838 = vmatpush1.bf16.xpose.msra.mxu0 0
        %839 = vmatprep.mubr.bf16.mxu0 0
        %840 = vmatmul.mubr.bf16.gmra.mrb[0].mxu0 %v802
        %v841 = vpop.f32.mrb[0].mxu0
        %v842 = vadd.f32 0.0, %v841
        %v843 = vpop.f32.mrb[0].mxu0
        %v844 = vpop.f32.mrb[0].mxu0
        %v845 = vpop.f32.mrb[0].mxu0
        %846 = vdwg.mxu0
        %v847 = vsel %vm751, %v793, -inf
        %848 = vmax.xlane.f32.xlu0 %v847
        %v849 = vpop.xlane.xlu0 %848
        %v850 = vsel %vm751, %v842, -inf
        %851 = vmax.xlane.f32.xlu0 %v850
        %v852 = vpop.xlane.xlu0 %851
        %v853 = vsub.f32 %v793, %v849
        %v854 = vsub.f32 %v842, %v852
        %v855 = vmul.f32 %v853, 1.442695
        %v856 = vpow.pop %v855
        %v857 = vmul.f32 %v854, 1.442695
        %v858 = vpow.pop %v857
        %v859 = vsel %vm751, %v856, 0.0
        %860 = vadd.xlane.f32.xlu0 %v859
        %v861 = vpop.xlane.xlu0 %860
        %v862 = vsel %vm751, %v858, 0.0
        %863 = vadd.xlane.f32.xlu0 %v862
        %v864 = vpop.xlane.xlu0 %863
        %v865 = vpack.c.bf16 %v856, %v856
        %v866 = vpack.c.bf16 %v858, %v858
        %867 = vrot.lane.b32.xlu0 %v746, 96
        %v868 = vpop.permute.xlu0 %867
        %v870 = vsel %vm751, %v865, 0
        %vm872 = vcmask 1043456
        %v874 = vsel %vm872, %v868, 0
        %876 = vmatprep.subr.bf16.mxu0 0
        %877 = vmatpush1.bf16.msra.mxu0 %v874
        %878 = vmatprep.subr.bf16.mxu0 0
        %879 = vmatpush1.bf16.msra.mxu0 0
        %880 = vmatprep.subr.bf16.mxu0 0
        %881 = vmatpush1.bf16.msra.mxu0 0
        %882 = vmatprep.subr.bf16.mxu0 0
        %883 = vmatpush1.bf16.msra.mxu0 0
        %884 = vmatprep.subr.bf16.mxu0 0
        %885 = vmatpush1.bf16.msra.mxu0 0
        %886 = vmatprep.subr.bf16.mxu0 0
        %887 = vmatpush1.bf16.msra.mxu0 0
        %888 = vmatprep.subr.bf16.mxu0 0
        %889 = vmatpush1.bf16.msra.mxu0 0
        %890 = vmatprep.subr.bf16.mxu0 0
        %891 = vmatpush1.bf16.msra.mxu0 0
        %892 = vmatprep.subr.bf16.mxu0 0
        %893 = vmatpush1.bf16.msra.mxu0 0
        %894 = vmatprep.subr.bf16.mxu0 0
        %895 = vmatpush1.bf16.msra.mxu0 0
        %896 = vmatprep.subr.bf16.mxu0 0
        %897 = vmatpush1.bf16.msra.mxu0 0
        %898 = vmatprep.subr.bf16.mxu0 0
        %899 = vmatpush1.bf16.msra.mxu0 0
        %900 = vmatprep.subr.bf16.mxu0 0
        %901 = vmatpush1.bf16.msra.mxu0 0
        %902 = vmatprep.subr.bf16.mxu0 0
        %903 = vmatpush1.bf16.msra.mxu0 0
        %904 = vmatprep.subr.bf16.mxu0 0
        %905 = vmatpush1.bf16.msra.mxu0 0
        %906 = vmatprep.subr.bf16.mxu0 0
        %907 = vmatpush1.bf16.msra.mxu0 0
        %908 = vmatprep.mubr.bf16.mxu0 0
        %909 = vmatmul.mubr.bf16.gmra.mrb[0].mxu0 %v870
        %v910 = vpop.f32.mrb[0].mxu0
        %v911 = vadd.f32 0.0, %v910
        %v912 = vpop.f32.mrb[0].mxu0
        %v913 = vpop.f32.mrb[0].mxu0
        %v914 = vpop.f32.mrb[0].mxu0
        %915 = vdwg.mxu0
        %916 = vrot.lane.b32.xlu0 %v747, 96
        %v917 = vpop.permute.xlu0 %916
        %v919 = vsel %vm751, %v866, 0
        %v922 = vsel %vm872, %v917, 0
        %924 = vmatprep.subr.bf16.mxu0 0
        %925 = vmatpush1.bf16.msra.mxu0 %v922
        %926 = vmatprep.subr.bf16.mxu0 0
        %927 = vmatpush1.bf16.msra.mxu0 0
        %928 = vmatprep.subr.bf16.mxu0 0
        %929 = vmatpush1.bf16.msra.mxu0 0
        %930 = vmatprep.subr.bf16.mxu0 0
        %931 = vmatpush1.bf16.msra.mxu0 0
        %932 = vmatprep.subr.bf16.mxu0 0
        %933 = vmatpush1.bf16.msra.mxu0 0
        %934 = vmatprep.subr.bf16.mxu0 0
        %935 = vmatpush1.bf16.msra.mxu0 0
        %936 = vmatprep.subr.bf16.mxu0 0
        %937 = vmatpush1.bf16.msra.mxu0 0
        %938 = vmatprep.subr.bf16.mxu0 0
        %939 = vmatpush1.bf16.msra.mxu0 0
        %940 = vmatprep.subr.bf16.mxu0 0
        %941 = vmatpush1.bf16.msra.mxu0 0
        %942 = vmatprep.subr.bf16.mxu0 0
        %943 = vmatpush1.bf16.msra.mxu0 0
        %944 = vmatprep.subr.bf16.mxu0 0
        %945 = vmatpush1.bf16.msra.mxu0 0
        %946 = vmatprep.subr.bf16.mxu0 0
        %947 = vmatpush1.bf16.msra.mxu0 0
        %948 = vmatprep.subr.bf16.mxu0 0
        %949 = vmatpush1.bf16.msra.mxu0 0
        %950 = vmatprep.subr.bf16.mxu0 0
        %951 = vmatpush1.bf16.msra.mxu0 0
        %952 = vmatprep.subr.bf16.mxu0 0
        %953 = vmatpush1.bf16.msra.mxu0 0
        %954 = vmatprep.subr.bf16.mxu0 0
        %955 = vmatpush1.bf16.msra.mxu0 0
        %956 = vmatprep.mubr.bf16.mxu0 0
        %957 = vmatmul.mubr.bf16.gmra.mrb[0].mxu0 %v919
        %v958 = vpop.f32.mrb[0].mxu0
        %v959 = vadd.f32 0.0, %v958
        %v960 = vpop.f32.mrb[0].mxu0
        %v961 = vpop.f32.mrb[0].mxu0
        %v962 = vpop.f32.mrb[0].mxu0
        %963 = vdwg.mxu0
        %v964 = vrcp.pop %v861
        %v965 = vrcp.pop %v864
        %v966 = vmul.f32 %v911, %v964
        %v967 = vmul.f32 %v959, %v965
        %968 = vrot.lane.b32.xlu0 %v746, 120
        %v969 = vpop.permute.xlu0 %968
        %970 = vrot.lane.b32.xlu0 %v746, 104
        %v971 = vpop.permute.xlu0 %970
        %v973 = vsel %vm751, %v969, 0
        %v976 = vsel %vm751, %v971, 0
        %978 = vmatprep.subr.bf16.mxu0 0
        %979 = vmatpush1.bf16.xpose.msra.mxu0 %v976
        %980 = vmatprep.subr.bf16.mxu0 0
        %981 = vmatpush1.bf16.xpose.msra.mxu0 0
        %982 = vmatprep.subr.bf16.mxu0 0
        %983 = vmatpush1.bf16.xpose.msra.mxu0 0
        %984 = vmatprep.subr.bf16.mxu0 0
        %985 = vmatpush1.bf16.xpose.msra.mxu0 0
        %986 = vmatprep.subr.bf16.mxu0 0
        %987 = vmatpush1.bf16.xpose.msra.mxu0 0
        %988 = vmatprep.subr.bf16.mxu0 0
        %989 = vmatpush1.bf16.xpose.msra.mxu0 0
        %990 = vmatprep.subr.bf16.mxu0 0
        %991 = vmatpush1.bf16.xpose.msra.mxu0 0
        %992 = vmatprep.subr.bf16.mxu0 0
        %993 = vmatpush1.bf16.xpose.msra.mxu0 0
        %994 = vmatprep.subr.bf16.mxu0 0
        %995 = vmatpush1.bf16.xpose.msra.mxu0 0
        %996 = vmatprep.subr.bf16.mxu0 0
        %997 = vmatpush1.bf16.xpose.msra.mxu0 0
        %998 = vmatprep.subr.bf16.mxu0 0
        %999 = vmatpush1.bf16.xpose.msra.mxu0 0
        %1000 = vmatprep.subr.bf16.mxu0 0
        %1001 = vmatpush1.bf16.xpose.msra.mxu0 0
        %1002 = vmatprep.subr.bf16.mxu0 0
        %1003 = vmatpush1.bf16.xpose.msra.mxu0 0
        %1004 = vmatprep.subr.bf16.mxu0 0
        %1005 = vmatpush1.bf16.xpose.msra.mxu0 0
        %1006 = vmatprep.subr.bf16.mxu0 0
        %1007 = vmatpush1.bf16.xpose.msra.mxu0 0
        %1008 = vmatprep.subr.bf16.mxu0 0
        %1009 = vmatpush1.bf16.xpose.msra.mxu0 0
        %1010 = vmatprep.mubr.bf16.mxu0 0
        %1011 = vmatmul.mubr.bf16.gmra.mrb[0].mxu0 %v973
        %v1012 = vpop.f32.mrb[0].mxu0
        %v1013 = vadd.f32 0.0, %v1012
        %v1014 = vpop.f32.mrb[0].mxu0
        %v1015 = vpop.f32.mrb[0].mxu0
        %v1016 = vpop.f32.mrb[0].mxu0
        %1017 = vdwg.mxu0
        %1018 = vrot.lane.b32.xlu0 %v747, 120
        %v1019 = vpop.permute.xlu0 %1018
        %1020 = vrot.lane.b32.xlu0 %v747, 104
        %v1021 = vpop.permute.xlu0 %1020
        %v1023 = vsel %vm751, %v1019, 0
        %v1026 = vsel %vm751, %v1021, 0
        %1028 = vmatprep.subr.bf16.mxu0 0
        %1029 = vmatpush1.bf16.xpose.msra.mxu0 %v1026
        %1030 = vmatprep.subr.bf16.mxu0 0
        %1031 = vmatpush1.bf16.xpose.msra.mxu0 0
        %1032 = vmatprep.subr.bf16.mxu0 0
        %1033 = vmatpush1.bf16.xpose.msra.mxu0 0
        %1034 = vmatprep.subr.bf16.mxu0 0
        %1035 = vmatpush1.bf16.xpose.msra.mxu0 0
        %1036 = vmatprep.subr.bf16.mxu0 0
        %1037 = vmatpush1.bf16.xpose.msra.mxu0 0
        %1038 = vmatprep.subr.bf16.mxu0 0
        %1039 = vmatpush1.bf16.xpose.msra.mxu0 0
        %1040 = vmatprep.subr.bf16.mxu0 0
        %1041 = vmatpush1.bf16.xpose.msra.mxu0 0
        %1042 = vmatprep.subr.bf16.mxu0 0
        %1043 = vmatpush1.bf16.xpose.msra.mxu0 0
        %1044 = vmatprep.subr.bf16.mxu0 0
        %1045 = vmatpush1.bf16.xpose.msra.mxu0 0
        %1046 = vmatprep.subr.bf16.mxu0 0
        %1047 = vmatpush1.bf16.xpose.msra.mxu0 0
        %1048 = vmatprep.subr.bf16.mxu0 0
        %1049 = vmatpush1.bf16.xpose.msra.mxu0 0
        %1050 = vmatprep.subr.bf16.mxu0 0
        %1051 = vmatpush1.bf16.xpose.msra.mxu0 0
        %1052 = vmatprep.subr.bf16.mxu0 0
        %1053 = vmatpush1.bf16.xpose.msra.mxu0 0
        %1054 = vmatprep.subr.bf16.mxu0 0
        %1055 = vmatpush1.bf16.xpose.msra.mxu0 0
        %1056 = vmatprep.subr.bf16.mxu0 0
        %1057 = vmatpush1.bf16.xpose.msra.mxu0 0
        %1058 = vmatprep.subr.bf16.mxu0 0
        %1059 = vmatpush1.bf16.xpose.msra.mxu0 0
        %1060 = vmatprep.mubr.bf16.mxu0 0
        %1061 = vmatmul.mubr.bf16.gmra.mrb[0].mxu0 %v1023
        %v1062 = vpop.f32.mrb[0].mxu0
        %v1063 = vadd.f32 0.0, %v1062
        %v1064 = vpop.f32.mrb[0].mxu0
        %v1065 = vpop.f32.mrb[0].mxu0
        %v1066 = vpop.f32.mrb[0].mxu0
        %1067 = vdwg.mxu0
        %v1068 = vsel %vm751, %v1013, -inf
        %1069 = vmax.xlane.f32.xlu0 %v1068
        %v1070 = vpop.xlane.xlu0 %1069
        %v1071 = vsel %vm751, %v1063, -inf
        %1072 = vmax.xlane.f32.xlu0 %v1071
        %v1073 = vpop.xlane.xlu0 %1072
        %v1074 = vsub.f32 %v1013, %v1070
        %v1075 = vsub.f32 %v1063, %v1073
        %v1076 = vmul.f32 %v1074, 1.442695
        %v1077 = vpow.pop %v1076
        %v1078 = vmul.f32 %v1075, 1.442695
        %v1079 = vpow.pop %v1078
        %v1080 = vsel %vm751, %v1077, 0.0
        %1081 = vadd.xlane.f32.xlu0 %v1080
        %v1082 = vpop.xlane.xlu0 %1081
        %v1083 = vsel %vm751, %v1079, 0.0
        %1084 = vadd.xlane.f32.xlu0 %v1083
        %v1085 = vpop.xlane.xlu0 %1084
        %v1086 = vpack.c.bf16 %v1077, %v1077
        %v1087 = vpack.c.bf16 %v1079, %v1079
        %1088 = vrot.lane.b32.xlu0 %v746, 88
        %v1089 = vpop.permute.xlu0 %1088
        %v1091 = vsel %vm751, %v1086, 0
        %v1094 = vsel %vm872, %v1089, 0
        %1096 = vmatprep.subr.bf16.mxu0 0
        %1097 = vmatpush1.bf16.msra.mxu0 %v1094
        %1098 = vmatprep.subr.bf16.mxu0 0
        %1099 = vmatpush1.bf16.msra.mxu0 0
        %1100 = vmatprep.subr.bf16.mxu0 0
        %1101 = vmatpush1.bf16.msra.mxu0 0
        %1102 = vmatprep.subr.bf16.mxu0 0
        %1103 = vmatpush1.bf16.msra.mxu0 0
        %1104 = vmatprep.subr.bf16.mxu0 0
        %1105 = vmatpush1.bf16.msra.mxu0 0
        %1106 = vmatprep.subr.bf16.mxu0 0
        %1107 = vmatpush1.bf16.msra.mxu0 0
        %1108 = vmatprep.subr.bf16.mxu0 0
        %1109 = vmatpush1.bf16.msra.mxu0 0
        %1110 = vmatprep.subr.bf16.mxu0 0
        %1111 = vmatpush1.bf16.msra.mxu0 0
        %1112 = vmatprep.subr.bf16.mxu0 0
        %1113 = vmatpush1.bf16.msra.mxu0 0
        %1114 = vmatprep.subr.bf16.mxu0 0
        %1115 = vmatpush1.bf16.msra.mxu0 0
        %1116 = vmatprep.subr.bf16.mxu0 0
        %1117 = vmatpush1.bf16.msra.mxu0 0
        %1118 = vmatprep.subr.bf16.mxu0 0
        %1119 = vmatpush1.bf16.msra.mxu0 0
        %1120 = vmatprep.subr.bf16.mxu0 0
        %1121 = vmatpush1.bf16.msra.mxu0 0
        %1122 = vmatprep.subr.bf16.mxu0 0
        %1123 = vmatpush1.bf16.msra.mxu0 0
        %1124 = vmatprep.subr.bf16.mxu0 0
        %1125 = vmatpush1.bf16.msra.mxu0 0
        %1126 = vmatprep.subr.bf16.mxu0 0
        %1127 = vmatpush1.bf16.msra.mxu0 0
        %1128 = vmatprep.mubr.bf16.mxu0 0
        %1129 = vmatmul.mubr.bf16.gmra.mrb[0].mxu0 %v1091
        %v1130 = vpop.f32.mrb[0].mxu0
        %v1131 = vadd.f32 0.0, %v1130
        %v1132 = vpop.f32.mrb[0].mxu0
        %v1133 = vpop.f32.mrb[0].mxu0
        %v1134 = vpop.f32.mrb[0].mxu0
        %1135 = vdwg.mxu0
        %1136 = vrot.lane.b32.xlu0 %v747, 88
        %v1137 = vpop.permute.xlu0 %1136
        %v1139 = vsel %vm751, %v1087, 0
        %v1142 = vsel %vm872, %v1137, 0
        %1144 = vmatprep.subr.bf16.mxu0 0
        %1145 = vmatpush1.bf16.msra.mxu0 %v1142
        %1146 = vmatprep.subr.bf16.mxu0 0
        %1147 = vmatpush1.bf16.msra.mxu0 0
        %1148 = vmatprep.subr.bf16.mxu0 0
        %1149 = vmatpush1.bf16.msra.mxu0 0
        %1150 = vmatprep.subr.bf16.mxu0 0
        %1151 = vmatpush1.bf16.msra.mxu0 0
        %1152 = vmatprep.subr.bf16.mxu0 0
        %1153 = vmatpush1.bf16.msra.mxu0 0
        %1154 = vmatprep.subr.bf16.mxu0 0
        %1155 = vmatpush1.bf16.msra.mxu0 0
        %1156 = vmatprep.subr.bf16.mxu0 0
        %1157 = vmatpush1.bf16.msra.mxu0 0
        %1158 = vmatprep.subr.bf16.mxu0 0
        %1159 = vmatpush1.bf16.msra.mxu0 0
        %1160 = vmatprep.subr.bf16.mxu0 0
        %1161 = vmatpush1.bf16.msra.mxu0 0
        %1162 = vmatprep.subr.bf16.mxu0 0
        %1163 = vmatpush1.bf16.msra.mxu0 0
        %1164 = vmatprep.subr.bf16.mxu0 0
        %1165 = vmatpush1.bf16.msra.mxu0 0
        %1166 = vmatprep.subr.bf16.mxu0 0
        %1167 = vmatpush1.bf16.msra.mxu0 0
        %1168 = vmatprep.subr.bf16.mxu0 0
        %1169 = vmatpush1.bf16.msra.mxu0 0
        %1170 = vmatprep.subr.bf16.mxu0 0
        %1171 = vmatpush1.bf16.msra.mxu0 0
        %1172 = vmatprep.subr.bf16.mxu0 0
        %1173 = vmatpush1.bf16.msra.mxu0 0
        %1174 = vmatprep.subr.bf16.mxu0 0
        %1175 = vmatpush1.bf16.msra.mxu0 0
        %1176 = vmatprep.mubr.bf16.mxu0 0
        %1177 = vmatmul.mubr.bf16.gmra.mrb[0].mxu0 %v1139
        %v1178 = vpop.f32.mrb[0].mxu0
        %v1179 = vadd.f32 0.0, %v1178
        %v1180 = vpop.f32.mrb[0].mxu0
        %v1181 = vpop.f32.mrb[0].mxu0
        %v1182 = vpop.f32.mrb[0].mxu0
        %1183 = vdwg.mxu0
        %v1184 = vrcp.pop %v1082
        %v1185 = vrcp.pop %v1085
        %v1186 = vmul.f32 %v1131, %v1184
        %v1187 = vmul.f32 %v1179, %v1185
        %1190 = vrot.lane.b32.xlu0 %v1186, 8
        %v1191 = vpop.permute.xlu0 %1190
        %1192 = vrot.lane.b32.xlu0 %v1187, 8
        %v1193 = vpop.permute.xlu0 %1192
        %v1196 = vsel %vm751, %v966, %v1191
        %v1197 = vsel %vm751, %v967, %v1193
        %v1198 = vpack.c.bf16 %v1197, %v1196
        %v1199 = vld [vmem:[%s583] sm:$0xf]
        %v1200 = vld [vmem:[%s583 + $0x4] sm:$0xf]
        %v1201 = vld [vmem:[%s586] sm:$0x1]
        %v1203 = vlaneseq
        %v1204 = vshrl.u32 %v1203, 7
        %v1205 = vsub.s32 0, %v1204
        %v1206 = vrot.slane %v1201, %v1205
        %v1210 = vunpack.c.l.b16 %v1199
        %v1211 = vunpack.c.l.b16 %v1200
        %v1212 = vpack.c.b16 %v1211, %v1210
        %vm1214 = vcmask 130048
        %v1216 = vsel %vm1214, %v1198, 0
        %1218 = vmatprep.subr.bf16.mxu0 0
        %1219 = vmatpush1.bf16.msra.mxu0 %v1212
        %1220 = vmatprep.subr.bf16.mxu0 0
        %1221 = vmatpush1.bf16.msra.mxu0 0
        %1222 = vmatprep.subr.bf16.mxu0 0
        %1223 = vmatpush1.bf16.msra.mxu0 0
        %1224 = vmatprep.subr.bf16.mxu0 0
        %1225 = vmatpush1.bf16.msra.mxu0 0
        %1226 = vmatprep.subr.bf16.mxu0 0
        %1227 = vmatpush1.bf16.msra.mxu0 0
        %1228 = vmatprep.subr.bf16.mxu0 0
        %1229 = vmatpush1.bf16.msra.mxu0 0
        %1230 = vmatprep.subr.bf16.mxu0 0
        %1231 = vmatpush1.bf16.msra.mxu0 0
        %1232 = vmatprep.subr.bf16.mxu0 0
        %1233 = vmatpush1.bf16.msra.mxu0 0
        %1234 = vmatprep.subr.bf16.mxu0 0
        %1235 = vmatpush1.bf16.msra.mxu0 0
        %1236 = vmatprep.subr.bf16.mxu0 0
        %1237 = vmatpush1.bf16.msra.mxu0 0
        %1238 = vmatprep.subr.bf16.mxu0 0
        %1239 = vmatpush1.bf16.msra.mxu0 0
        %1240 = vmatprep.subr.bf16.mxu0 0
        %1241 = vmatpush1.bf16.msra.mxu0 0
        %1242 = vmatprep.subr.bf16.mxu0 0
        %1243 = vmatpush1.bf16.msra.mxu0 0
        %1244 = vmatprep.subr.bf16.mxu0 0
        %1245 = vmatpush1.bf16.msra.mxu0 0
        %1246 = vmatprep.subr.bf16.mxu0 0
        %1247 = vmatpush1.bf16.msra.mxu0 0
        %1248 = vmatprep.subr.bf16.mxu0 0
        %1249 = vmatpush1.bf16.msra.mxu0 0
        %1250 = vmatprep.mubr.bf16.mxu0 0
        %1251 = vmatmul.mubr.bf16.gmra.mrb[0].mxu0 %v1216
        %v1252 = vpop.f32.mrb[0].mxu0
        %v1253 = vadd.f32 %v1206, %v1252
        %v1254 = vpop.f32.mrb[0].mxu0
        %v1255 = vpop.f32.mrb[0].mxu0
        %v1256 = vadd.f32 %v1206, %v1255
        %v1257 = vpop.f32.mrb[0].mxu0
        %1258 = vdwg.mxu0
        %v1259 = vadd.f32 %v1253, %v675
        %v1260 = vadd.f32 %v1256, %v676
        %v1261 = vpack.c.bf16 %v1260, %v1259
        %v1262 = vld [vmem:[%s591] sm:$0xf]
        %v1263 = vld [vmem:[%s591 + $0x4] sm:$0xf]
        %v1264 = vld [vmem:[%s591 + $0x8] sm:$0xf]
        %v1265 = vld [vmem:[%s591 + $0xc] sm:$0xf]
        %v1266 = vld [vmem:[%s496] sm:$0x1]
        %v1268 = vlaneseq
        %v1269 = vshrl.u32 %v1268, 7
        %v1270 = vsub.s32 0, %v1269
        %v1271 = vrot.slane %v1266, %v1270
        %v1277 = vunpack.c.l.b16 %v1262
        %v1278 = vunpack.c.l.b16 %v1263
        %v1279 = vunpack.c.l.b16 %v1264
        %v1280 = vunpack.c.l.b16 %v1265
        %v1281 = vpack.c.b16 %v1278, %v1277
        %v1282 = vpack.c.b16 %v1280, %v1279
        %v1286 = vsel %vm701, %v1261, 0
        %1288 = vmatprep.subr.bf16.mxu0 0
        %1289 = vmatpush1.bf16.msra.mxu0 %v1281
        %1290 = vmatprep.subr.bf16.mxu0 0
        %1291 = vmatpush1.bf16.msra.mxu0 %v1282
        %1292 = vmatprep.subr.bf16.mxu0 0
        %1293 = vmatpush1.bf16.msra.mxu0 0
        %1294 = vmatprep.subr.bf16.mxu0 0
        %1295 = vmatpush1.bf16.msra.mxu0 0
        %1296 = vmatprep.subr.bf16.mxu0 0
        %1297 = vmatpush1.bf16.msra.mxu0 0
        %1298 = vmatprep.subr.bf16.mxu0 0
        %1299 = vmatpush1.bf16.msra.mxu0 0
        %1300 = vmatprep.subr.bf16.mxu0 0
        %1301 = vmatpush1.bf16.msra.mxu0 0
        %1302 = vmatprep.subr.bf16.mxu0 0
        %1303 = vmatpush1.bf16.msra.mxu0 0
        %1304 = vmatprep.subr.bf16.mxu0 0
        %1305 = vmatpush1.bf16.msra.mxu0 0
        %1306 = vmatprep.subr.bf16.mxu0 0
        %1307 = vmatpush1.bf16.msra.mxu0 0
        %1308 = vmatprep.subr.bf16.mxu0 0
        %1309 = vmatpush1.bf16.msra.mxu0 0
        %1310 = vmatprep.subr.bf16.mxu0 0
        %1311 = vmatpush1.bf16.msra.mxu0 0
        %1312 = vmatprep.subr.bf16.mxu0 0
        %1313 = vmatpush1.bf16.msra.mxu0 0
        %1314 = vmatprep.subr.bf16.mxu0 0
        %1315 = vmatpush1.bf16.msra.mxu0 0
        %1316 = vmatprep.subr.bf16.mxu0 0
        %1317 = vmatpush1.bf16.msra.mxu0 0
        %1318 = vmatprep.subr.bf16.mxu0 0
        %1319 = vmatpush1.bf16.msra.mxu0 0
        %1320 = vmatprep.mubr.bf16.mxu0 0
        %1321 = vmatmul.mubr.bf16.gmra.mrb[0].mxu0 %v1286
        %v1322 = vpop.f32.mrb[0].mxu0
        %v1323 = vadd.f32 %v1271, %v1322
        %v1324 = vpop.f32.mrb[0].mxu0
        %v1325 = vpop.f32.mrb[0].mxu0
        %v1326 = vadd.f32 %v1271, %v1325
        %v1327 = vpop.f32.mrb[0].mxu0
        %1328 = vdwg.mxu0
        %v1329 = vmax.f32 %v1323, 0.0
        %v1330 = vmax.f32 %v1326, 0.0
        %v1331 = vpack.c.bf16 %v1330, %v1329
        %v1332 = vld [vmem:[%s596] sm:$0xf]
        %v1333 = vld [vmem:[%s596 + $0x4] sm:$0xf]
        %v1334 = vld [vmem:[%s596 + $0x8] sm:$0xf]
        %v1335 = vld [vmem:[%s596 + $0xc] sm:$0xf]
        %v1336 = vld [vmem:[%s596 + $0x10] sm:$0xf]
        %v1337 = vld [vmem:[%s596 + $0x14] sm:$0xf]
        %v1338 = vld [vmem:[%s596 + $0x18] sm:$0xf]
        %v1339 = vld [vmem:[%s596 + $0x1c] sm:$0xf]
        %v1340 = vld [vmem:[%s599] sm:$0x1]
        %v1342 = vlaneseq
        %v1343 = vshrl.u32 %v1342, 7
        %v1344 = vsub.s32 0, %v1343
        %v1345 = vrot.slane %v1340, %v1344
        %v1355 = vunpack.c.l.b16 %v1332
        %v1356 = vunpack.c.l.b16 %v1333
        %v1357 = vunpack.c.l.b16 %v1334
        %v1358 = vunpack.c.l.b16 %v1335
        %v1359 = vunpack.c.l.b16 %v1336
        %v1360 = vunpack.c.l.b16 %v1337
        %v1361 = vunpack.c.l.b16 %v1338
        %v1362 = vunpack.c.l.b16 %v1339
        %v1363 = vpack.c.b16 %v1356, %v1355
        %v1364 = vpack.c.b16 %v1358, %v1357
        %v1365 = vpack.c.b16 %v1360, %v1359
        %v1366 = vpack.c.b16 %v1362, %v1361
        %vm1371 = vcmask 523264
        %v1373 = vsel %vm1371, %v1331, 0
        %1375 = vmatprep.subr.bf16.mxu0 0
        %1376 = vmatpush1.bf16.msra.mxu0 %v1363
        %1377 = vmatprep.subr.bf16.mxu0 0
        %1378 = vmatpush1.bf16.msra.mxu0 %v1364
        %1379 = vmatprep.subr.bf16.mxu0 0
        %1380 = vmatpush1.bf16.msra.mxu0 %v1365
        %1381 = vmatprep.subr.bf16.mxu0 0
        %1382 = vmatpush1.bf16.msra.mxu0 %v1366
        %1383 = vmatprep.subr.bf16.mxu0 0
        %1384 = vmatpush1.bf16.msra.mxu0 0
        %1385 = vmatprep.subr.bf16.mxu0 0
        %1386 = vmatpush1.bf16.msra.mxu0 0
        %1387 = vmatprep.subr.bf16.mxu0 0
        %1388 = vmatpush1.bf16.msra.mxu0 0
        %1389 = vmatprep.subr.bf16.mxu0 0
        %1390 = vmatpush1.bf16.msra.mxu0 0
        %1391 = vmatprep.subr.bf16.mxu0 0
        %1392 = vmatpush1.bf16.msra.mxu0 0
        %1393 = vmatprep.subr.bf16.mxu0 0
        %1394 = vmatpush1.bf16.msra.mxu0 0
        %1395 = vmatprep.subr.bf16.mxu0 0
        %1396 = vmatpush1.bf16.msra.mxu0 0
        %1397 = vmatprep.subr.bf16.mxu0 0
        %1398 = vmatpush1.bf16.msra.mxu0 0
        %1399 = vmatprep.subr.bf16.mxu0 0
        %1400 = vmatpush1.bf16.msra.mxu0 0
        %1401 = vmatprep.subr.bf16.mxu0 0
        %1402 = vmatpush1.bf16.msra.mxu0 0
        %1403 = vmatprep.subr.bf16.mxu0 0
        %1404 = vmatpush1.bf16.msra.mxu0 0
        %1405 = vmatprep.subr.bf16.mxu0 0
        %1406 = vmatpush1.bf16.msra.mxu0 0
        %1407 = vmatprep.mubr.bf16.mxu0 0
        %1408 = vmatmul.mubr.bf16.gmra.mrb[0].mxu0 %v1373
        %v1409 = vpop.f32.mrb[0].mxu0
        %v1410 = vadd.f32 %v1345, %v1409
        %v1411 = vpop.f32.mrb[0].mxu0
        %v1412 = vpop.f32.mrb[0].mxu0
        %v1413 = vadd.f32 %v1345, %v1412
        %v1414 = vpop.f32.mrb[0].mxu0
        %1415 = vdwg.mxu0
        %v1416 = vadd.f32 %v1410, %v1259
        %v1417 = vadd.f32 %v1413, %v1260
        %1418 = vst.msk [vmem:[#allocation2] sm:$0xff] %vm701, %v1416
        %1419 = vst.msk [vmem:[#allocation2 + $0x8] sm:$0xff] %vm701, %v1417
        %p1420 = scmp.eq.s32.totalorder %s31, 1
        // Predicated region
        $region85: #{tpu_custom_call.1} parent=67 // pred_check
          %p1421 = pneg %p1420
        $region86: #{tpu_custom_call.1} parent=67 // pred_check_branch
          %1423 = sbr.rel (%p1421) target = $region88
        $region87: #{tpu_custom_call.1} parent=67 // pred_region
          %1424 = vst.msk [vmem:[#allocation9] sm:$0xff] %vm701, %v1416
          %1425 = vst.msk [vmem:[#allocation9 + $0x8] sm:$0xff] %vm701, %v1417
        $region88: #{tpu_custom_call.1} parent=67 // pred_fallthru
          _
        // Predicated region
        $region89: #{tpu_custom_call.1} parent=67 // pred_check
          %p1426 = pneg %p353
        $region90: #{tpu_custom_call.1} parent=67 // pred_check_branch
          %1428 = sbr.rel (%p1426) target = $region92
        $region91: #{tpu_custom_call.1} parent=67 // pred_region
          %s1429 = smul.u32 2, %s30
          %s1431 = ssub.s32 256, 256
          %1432 = vsyncadd [#allocation5], %s1431
          %s1433 = smul.addr %s1429, 128
          %s1434 = scalar_lea.hbm %s12, %s1433
          %s1435 = sshll.u32 [#allocation9], 4
          %s1436 = int_to_ptr.vmem [resolvable:$true] %s1435
          %1441 = dma.vmem_to_hbm [thread:$0]  %s1436, 256, %s1434, [#allocation5], 128, 128, 8
        $region92: #{tpu_custom_call.1} parent=67 // pred_fallthru
          _
        // Predicated region
        $region93: #{tpu_custom_call.1} parent=67 // pred_check
          %p1442 = pneg %p353
        $region94: #{tpu_custom_call.1} parent=67 // pred_check_branch
          %1444 = sbr.rel (%p1442) target = $region96
        $region95: #{tpu_custom_call.1} parent=67 // pred_region
          %1445 = dma.done [#allocation5], 256
        $region96: #{tpu_custom_call.1} parent=67 // pred_fallthru
          _
      $region68: #{tpu_custom_call.1} parent=5 // pred_fallthru
        _
      %p1446 = scmp.le.s32.totalorder 2, %s21
      // Predicated region
      $region97: #{tpu_custom_call.1} parent=5 // pred_check
        %p1447 = pneg %p1446
      $region98: #{tpu_custom_call.1} parent=5 // pred_check_branch
        %1449 = sbr.rel (%p1447) target = $region100
      $region99: #{tpu_custom_call.1} parent=5 // pred_region
        %s1450 = ssub.s32 %s21, 2
      $region100: #{tpu_custom_call.1} parent=5 // pred_fallthru
        _
    $region6: #{tpu_custom_call.1} parent=1 // loop_footer
      %s25 = sadd.s32 1, %s21
    $region7: #{tpu_custom_call.1} parent=1 // loop_footer_branch
      %20 = sbr.rel target = $region3
    $region8: #{tpu_custom_call.1} parent=1 // loop_exit
      _
    %1451 = vsyncpa [#allocation4], 1
    %s1452 = scalar_lea.sflag [#allocation4], 1
    %1453 = vsyncpa %s1452, 1
    %1454 = vsyncpa [#allocation7], 1
    %1455 = vsyncpa [#allocation5], 1
    %s1456 = scalar_lea.sflag [#allocation5], 1
    %1457 = vsyncpa %s1456, 1

</llo_original>
